<compile_context>
chip_gen: v6e
topology: v6e:2x2x1
jax: 0.10.0
libtpu: 0.0.40
codegen_flags: <defaults>
</compile_context>

<pallas_src>
import numpy as np
import jax
import jax.numpy as jnp
from jax import lax
from jax.experimental import pallas as pl
from jax.experimental.pallas import tpu as pltpu

EPS = 1e-5


def double_conv_kernel(x_ref, a1_ref, a2_ref, qn_ref,
                       g1_ref, b1_ref, g2_ref, b2_ref,
                       out_ref, h1p_ref, acc_ref):
    # x_ref  : (N, H+2, W*Cin)    bf16, zero-padded in H only (W padding is
    #                             folded into the banded weight matrices)
    # a1_ref : (3, W*Cin,  W*Cout) bf16 banded weights, one per kernel row dy
    # a2_ref : (3, W*Cout, W*Cout) bf16
    # qn_ref : (W*Cout, W*Cout)   f32 channel-pool matrix / (N*H*W)
    # g*/b*  : (1, W*Cout)        f32 gamma/beta tiled onto the packed lanes
    # out_ref: (N*H, W*Cout)      f32 lane-dense output
    # h1p_ref: (N, H+2, W*Cout)   bf16 scratch: H-halo-padded conv1 activation
    # acc_ref: (N*H, W*Cout)      f32 scratch accumulator (reused by both convs)
    N, Hp, WCi = x_ref.shape
    H = Hp - 2
    M, WCo = out_ref.shape
    qn = qn_ref[...]

    def bn_relu(acc, g_ref, b_ref):
        # training-mode batch stats over (N, H, W) per channel, folded affine
        mean = jnp.dot(jnp.sum(acc, axis=0, keepdims=True), qn,
                       preferred_element_type=jnp.float32)      # (1, W*Cout)
        cen = acc - mean
        var = jnp.dot(jnp.sum(cen * cen, axis=0, keepdims=True), qn,
                      preferred_element_type=jnp.float32)
        scale = g_ref[...] * lax.rsqrt(var + EPS)
        return jnp.maximum(cen * scale + b_ref[...], 0.0)

    # ---- conv1: 3 banded matmuls (one per kernel row), f32 ref accumulation ----
    acc_ref[...] = jnp.zeros_like(acc_ref)
    for dy in range(3):                                   # static unroll
        lhs = x_ref[:, dy:dy + H, :].reshape(M, WCi)      # (N*H, W*Cin) bf16
        acc_ref[...] += jnp.dot(lhs, a1_ref[dy],
                                preferred_element_type=jnp.float32)
    h1 = bn_relu(acc_ref[...], g1_ref, b1_ref)

    # ---- halo-pad h1 in H: zero only the two halo rows, write interior once ----
    h1p_ref[:, 0:1, :] = jnp.zeros((N, 1, WCo), jnp.bfloat16)
    h1p_ref[:, Hp - 1:Hp, :] = jnp.zeros((N, 1, WCo), jnp.bfloat16)
    h1p_ref[:, 1:H + 1, :] = h1.astype(jnp.bfloat16).reshape(N, H, WCo)

    # ---- conv2: same structure on the packed intermediate ----
    acc_ref[...] = jnp.zeros_like(acc_ref)
    for dy in range(3):
        lhs = h1p_ref[:, dy:dy + H, :].reshape(M, WCo)    # (N*H, W*Cout) bf16
        acc_ref[...] += jnp.dot(lhs, a2_ref[dy],
                                preferred_element_type=jnp.float32)

    # ---- batchnorm2 + ReLU, lane-dense writeback ----
    out_ref[...] = bn_relu(acc_ref[...], g2_ref, b2_ref)


def _banded_weights(wt, Ci, Co, W):
    """Fold the 3 column taps + width zero-padding of a 3x3 conv into banded
    block matrices, one per kernel row:
      A[dy][wi*Ci + ci, wo*Co + co] = wt[co, ci, dy, wi - wo + 1]  (|wi-wo|<=1)
    so a whole conv row becomes ONE matmul in the (W*C)-packed lane layout."""
    S = np.zeros((3, W, W), np.float32)          # S[dx, w_in, w_out]
    for dx in range(3):
        for wo in range(W):
            wi = wo + dx - 1
            if 0 <= wi < W:
                S[dx, wi, wo] = 1.0
    a = jnp.einsum('xab,oidx->daibo', jnp.asarray(S), wt.astype(jnp.float32))
    return a.reshape(3, W * Ci, W * Co)


def double_conv_block(x_nchw, w1, g1, b1, w2, g2, b2):
    """x_nchw: (N, Cin, H, W); w1: (Cout, Cin, 3, 3); w2: (Cout, Cout, 3, 3)."""
    N, Cin, H, W = x_nchw.shape
    Cout = w1.shape[0]

    # --- glue: NCHW -> lane-packed (N, H+2, W*Cin), bf16 matmul operands ---
    x = jnp.transpose(x_nchw, (0, 2, 3, 1))                   # NHWC
    x = jnp.pad(x, ((0, 0), (1, 1), (0, 0), (0, 0)))          # pad H only
    xp = x.reshape(N, H + 2, W * Cin).astype(jnp.bfloat16)

    a1 = _banded_weights(w1, Cin, Cout, W).astype(jnp.bfloat16)   # (3, W*Cin,  W*Cout)
    a2 = _banded_weights(w2, Cout, Cout, W).astype(jnp.bfloat16)  # (3, W*Cout, W*Cout)

    # channel-pooling matrix (packed lanes -> per-channel sum, broadcast back
    # onto packed lanes), pre-scaled by 1/(N*H*W) so the kernel gets means.
    qn = jnp.asarray(np.tile(np.eye(Cout, dtype=np.float32), (W, W)) / (N * H * W))

    g1l = jnp.tile(g1.reshape(1, Cout).astype(jnp.float32), (1, W))
    b1l = jnp.tile(b1.reshape(1, Cout).astype(jnp.float32), (1, W))
    g2l = jnp.tile(g2.reshape(1, Cout).astype(jnp.float32), (1, W))
    b2l = jnp.tile(b2.reshape(1, Cout).astype(jnp.float32), (1, W))

    vmem = pl.BlockSpec(memory_space=pltpu.MemorySpace.VMEM)
    # TODO(synk): for large N*H*W add a grid over row tiles with a two-pass BN
    # (cross-tile stats) and dimension_semantics=("parallel",) so v7x's two
    # TensorCores split the work; at these shapes one VMEM-resident block wins.
    out2d = pl.pallas_call(
        double_conv_kernel,
        out_shape=jax.ShapeDtypeStruct((N * H, W * Cout), jnp.float32),
        in_specs=[vmem] * 8,
        out_specs=vmem,
        scratch_shapes=[
            pltpu.VMEM((N, H + 2, W * Cout), jnp.bfloat16),   # halo-padded h1
            pltpu.VMEM((N * H, W * Cout), jnp.float32),       # conv accumulator
        ],
        compiler_params=pltpu.CompilerParams(vmem_limit_bytes=32 * 1024 * 1024),
    )(xp, a1, a2, qn, g1l, b1l, g2l, b2l)

    # unpack lane-dense (N*H, W*Cout) -> NCHW
    return jnp.transpose(out2d.reshape(N, H, W, Cout), (0, 3, 1, 2))


def _reference(x_nchw, w1, g1, b1, w2, g2, b2, conv_dtype=jnp.bfloat16):
    """Pure-JAX mirror of the PyTorch forward (training-mode BN).  Conv
    operands are cast to `conv_dtype` with f32 accumulation to match the
    kernel's bf16 MXU operands; BN / ReLU math is exact f32."""
    def conv(x, w):
        return lax.conv_general_dilated(
            x.astype(conv_dtype), w.astype(conv_dtype),
            window_strides=(1, 1), padding=((1, 1), (1, 1)),
            dimension_numbers=("NCHW", "OIHW", "NCHW"),
            preferred_element_type=jnp.float32)

    def bn_relu(y, g, b):
        mean = jnp.mean(y, axis=(0, 2, 3), keepdims=True)
        var = jnp.mean((y - mean) ** 2, axis=(0, 2, 3), keepdims=True)
        yn = (y - mean) * lax.rsqrt(var + EPS)
        yn = yn * g[None, :, None, None] + b[None, :, None, None]
        return jnp.maximum(yn, 0.0)

    h = bn_relu(conv(x_nchw, w1), g1, b1)
    return bn_relu(conv(h, w2), g2, b2)


if __name__ == "__main__":
    N, Cin, Cout, H, W = 2, 4, 8, 16, 16

    key = jax.random.PRNGKey(0)
    kx, kw1, kw2 = jax.random.split(key, 3)

    x = jax.random.normal(kx, (N, Cin, H, W), jnp.float32)
    # Deterministic synthetic weights (shapes match nn.Conv2d, bias=False).
    w1 = 0.1 * jax.random.normal(kw1, (Cout, Cin, 3, 3), jnp.float32)
    w2 = 0.1 * jax.random.normal(kw2, (Cout, Cout, 3, 3), jnp.float32)
    # BatchNorm2d affine params at their PyTorch init values.
    g1 = jnp.ones((Cout,), jnp.float32)
    b1 = jnp.zeros((Cout,), jnp.float32)
    g2 = jnp.ones((Cout,), jnp.float32)
    b2 = jnp.zeros((Cout,), jnp.float32)

    out = jax.block_until_ready(double_conv_block(x, w1, g1, b1, w2, g2, b2))
    assert out.shape == (N, Cout, H, W)

    ref = jax.block_until_ready(_reference(x, w1, g1, b1, w2, g2, b2))
    assert jnp.allclose(out, ref, atol=5e-3, rtol=5e-3), float(
        jnp.max(jnp.abs(out - ref)))

    print("KERNEL_OK")
</pallas_src>

<mosaic_0001>
module attributes {stable_mosaic.version = 11 : i64} {
  func.func @double_conv_kernel(%arg0: memref<2x18x64xbf16, #tpu.memory_space<vmem>>, %arg1: memref<3x64x128xbf16, #tpu.memory_space<vmem>>, %arg2: memref<3x128x128xbf16, #tpu.memory_space<vmem>>, %arg3: memref<128x128xf32, #tpu.memory_space<vmem>>, %arg4: memref<1x128xf32, #tpu.memory_space<vmem>>, %arg5: memref<1x128xf32, #tpu.memory_space<vmem>>, %arg6: memref<1x128xf32, #tpu.memory_space<vmem>>, %arg7: memref<1x128xf32, #tpu.memory_space<vmem>>, %arg8: memref<32x128xf32, #tpu.memory_space<vmem>>, %arg9: memref<2x18x128xbf16, #tpu.memory_space<vmem>>, %arg10: memref<32x128xf32, #tpu.memory_space<vmem>>) attributes {dimension_semantics = [], scalar_prefetch = 0 : i64, scratch_operands = 2 : i64, tpu.core_type = #tpu.core_type<tc>} {
    %c0 = arith.constant 0 : index
    %c0_0 = arith.constant 0 : index
    %0 = vector.load %arg3[%c0, %c0_0] : memref<128x128xf32, #tpu.memory_space<vmem>>, vector<128x128xf32>
    %cst = arith.constant 0.000000e+00 : f32
    %1 = vector.broadcast %cst : f32 to vector<32x128xf32>
    %c0_1 = arith.constant 0 : index
    %c0_2 = arith.constant 0 : index
    %2 = vector.load %arg10[%c0_1, %c0_2] : memref<32x128xf32, #tpu.memory_space<vmem>>, vector<32x128xf32>
    tpu.vector_store %arg10[%c0_1, %c0_2], %1 {strides = array<i32>} : memref<32x128xf32, #tpu.memory_space<vmem>>, vector<32x128xf32>,
    %c0_3 = arith.constant 0 : index
    %c0_4 = arith.constant 0 : index
    %c0_5 = arith.constant 0 : index
    %3 = vector.load %arg0[%c0_3, %c0_4, %c0_5] : memref<2x18x64xbf16, #tpu.memory_space<vmem>>, vector<2x16x64xbf16>
    %4 = vector.shape_cast %3 : vector<2x16x64xbf16> to vector<32x64xbf16>
    %c0_6 = arith.constant 0 : index
    %c0_7 = arith.constant 0 : index
    %5 = vector.load %arg10[%c0_6, %c0_7] : memref<32x128xf32, #tpu.memory_space<vmem>>, vector<32x128xf32>
    %c0_8 = arith.constant 0 : index
    %c0_9 = arith.constant 0 : index
    %c0_10 = arith.constant 0 : index
    %6 = vector.load %arg1[%c0_8, %c0_9, %c0_10] : memref<3x64x128xbf16, #tpu.memory_space<vmem>>, vector<1x64x128xbf16>
    %7 = vector.shape_cast %6 : vector<1x64x128xbf16> to vector<64x128xbf16>
    %cst_11 = arith.constant dense<0.000000e+00> : vector<32x128xf32>
    %8 = tpu.matmul %4, %7, %cst_11 {dimension_numbers = #tpu.dot_dimension_numbers<[1], [0], [0], [1], [0, 0, 1, 1], [], []>} : vector<32x64xbf16>, vector<64x128xbf16>, vector<32x128xf32> -> vector<32x128xf32>
    %9 = arith.addf %5, %8 : vector<32x128xf32>
    %c0_12 = arith.constant 0 : index
    %c0_13 = arith.constant 0 : index
    %10 = vector.load %arg10[%c0_12, %c0_13] : memref<32x128xf32, #tpu.memory_space<vmem>>, vector<32x128xf32>
    tpu.vector_store %arg10[%c0_12, %c0_13], %9 {strides = array<i32>} : memref<32x128xf32, #tpu.memory_space<vmem>>, vector<32x128xf32>,
    %c0_14 = arith.constant 0 : index
    %c1 = arith.constant 1 : index
    %c0_15 = arith.constant 0 : index
    %11 = vector.load %arg0[%c0_14, %c1, %c0_15] : memref<2x18x64xbf16, #tpu.memory_space<vmem>>, vector<2x16x64xbf16>
    %12 = vector.shape_cast %11 : vector<2x16x64xbf16> to vector<32x64xbf16>
    %c0_16 = arith.constant 0 : index
    %c0_17 = arith.constant 0 : index
    %13 = vector.load %arg10[%c0_16, %c0_17] : memref<32x128xf32, #tpu.memory_space<vmem>>, vector<32x128xf32>
    %c1_18 = arith.constant 1 : index
    %c0_19 = arith.constant 0 : index
    %c0_20 = arith.constant 0 : index
    %14 = vector.load %arg1[%c1_18, %c0_19, %c0_20] : memref<3x64x128xbf16, #tpu.memory_space<vmem>>, vector<1x64x128xbf16>
    %15 = vector.shape_cast %14 : vector<1x64x128xbf16> to vector<64x128xbf16>
    %cst_21 = arith.constant dense<0.000000e+00> : vector<32x128xf32>
    %16 = tpu.matmul %12, %15, %cst_21 {dimension_numbers = #tpu.dot_dimension_numbers<[1], [0], [0], [1], [0, 0, 1, 1], [], []>} : vector<32x64xbf16>, vector<64x128xbf16>, vector<32x128xf32> -> vector<32x128xf32>
    %17 = arith.addf %13, %16 : vector<32x128xf32>
    %c0_22 = arith.constant 0 : index
    %c0_23 = arith.constant 0 : index
    %18 = vector.load %arg10[%c0_22, %c0_23] : memref<32x128xf32, #tpu.memory_space<vmem>>, vector<32x128xf32>
    tpu.vector_store %arg10[%c0_22, %c0_23], %17 {strides = array<i32>} : memref<32x128xf32, #tpu.memory_space<vmem>>, vector<32x128xf32>,
    %c0_24 = arith.constant 0 : index
    %c2 = arith.constant 2 : index
    %c0_25 = arith.constant 0 : index
    %19 = vector.load %arg0[%c0_24, %c2, %c0_25] : memref<2x18x64xbf16, #tpu.memory_space<vmem>>, vector<2x16x64xbf16>
    %20 = vector.shape_cast %19 : vector<2x16x64xbf16> to vector<32x64xbf16>
    %c0_26 = arith.constant 0 : index
    %c0_27 = arith.constant 0 : index
    %21 = vector.load %arg10[%c0_26, %c0_27] : memref<32x128xf32, #tpu.memory_space<vmem>>, vector<32x128xf32>
    %c2_28 = arith.constant 2 : index
    %c0_29 = arith.constant 0 : index
    %c0_30 = arith.constant 0 : index
    %22 = vector.load %arg1[%c2_28, %c0_29, %c0_30] : memref<3x64x128xbf16, #tpu.memory_space<vmem>>, vector<1x64x128xbf16>
    %23 = vector.shape_cast %22 : vector<1x64x128xbf16> to vector<64x128xbf16>
    %cst_31 = arith.constant dense<0.000000e+00> : vector<32x128xf32>
    %24 = tpu.matmul %20, %23, %cst_31 {dimension_numbers = #tpu.dot_dimension_numbers<[1], [0], [0], [1], [0, 0, 1, 1], [], []>} : vector<32x64xbf16>, vector<64x128xbf16>, vector<32x128xf32> -> vector<32x128xf32>
    %25 = arith.addf %21, %24 : vector<32x128xf32>
    %c0_32 = arith.constant 0 : index
    %c0_33 = arith.constant 0 : index
    %26 = vector.load %arg10[%c0_32, %c0_33] : memref<32x128xf32, #tpu.memory_space<vmem>>, vector<32x128xf32>
    tpu.vector_store %arg10[%c0_32, %c0_33], %25 {strides = array<i32>} : memref<32x128xf32, #tpu.memory_space<vmem>>, vector<32x128xf32>,
    %c0_34 = arith.constant 0 : index
    %c0_35 = arith.constant 0 : index
    %27 = vector.load %arg10[%c0_34, %c0_35] : memref<32x128xf32, #tpu.memory_space<vmem>>, vector<32x128xf32>
    %cst_36 = arith.constant dense<0.000000e+00> : vector<128xf32>
    %28 = vector.multi_reduction <add>, %27, %cst_36 [0] : vector<32x128xf32> to vector<128xf32>
    %29 = vector.shape_cast %28 : vector<128xf32> to vector<1x128xf32>
    %cst_37 = arith.constant dense<0.000000e+00> : vector<1x128xf32>
    %30 = tpu.matmul %29, %0, %cst_37 {dimension_numbers = #tpu.dot_dimension_numbers<[1], [0], [0], [1], [0, 0, 1, 1], [], []>} : vector<1x128xf32>, vector<128x128xf32>, vector<1x128xf32> -> vector<1x128xf32>
    %31 = vector.broadcast %30 : vector<1x128xf32> to vector<32x128xf32>
    %32 = arith.subf %27, %31 : vector<32x128xf32>
    %33 = arith.mulf %32, %32 : vector<32x128xf32>
    %cst_38 = arith.constant dense<0.000000e+00> : vector<128xf32>
    %34 = vector.multi_reduction <add>, %33, %cst_38 [0] : vector<32x128xf32> to vector<128xf32>
    %35 = vector.shape_cast %34 : vector<128xf32> to vector<1x128xf32>
    %cst_39 = arith.constant dense<0.000000e+00> : vector<1x128xf32>
    %36 = tpu.matmul %35, %0, %cst_39 {dimension_numbers = #tpu.dot_dimension_numbers<[1], [0], [0], [1], [0, 0, 1, 1], [], []>} : vector<1x128xf32>, vector<128x128xf32>, vector<1x128xf32> -> vector<1x128xf32>
    %c0_40 = arith.constant 0 : index
    %c0_41 = arith.constant 0 : index
    %37 = vector.load %arg4[%c0_40, %c0_41] : memref<1x128xf32, #tpu.memory_space<vmem>>, vector<1x128xf32>
    %cst_42 = arith.constant 9.99999974E-6 : f32
    %38 = vector.broadcast %cst_42 : f32 to vector<1x128xf32>
    %39 = arith.addf %36, %38 : vector<1x128xf32>
    %40 = math.rsqrt %39 : vector<1x128xf32>
    %41 = arith.mulf %37, %40 : vector<1x128xf32>
    %42 = vector.broadcast %41 : vector<1x128xf32> to vector<32x128xf32>
    %43 = arith.mulf %32, %42 : vector<32x128xf32>
    %c0_43 = arith.constant 0 : index
    %c0_44 = arith.constant 0 : index
    %44 = vector.load %arg5[%c0_43, %c0_44] : memref<1x128xf32, #tpu.memory_space<vmem>>, vector<1x128xf32>
    %45 = vector.broadcast %44 : vector<1x128xf32> to vector<32x128xf32>
    %46 = arith.addf %43, %45 : vector<32x128xf32>
    %cst_45 = arith.constant 0.000000e+00 : f32
    %47 = vector.broadcast %cst_45 : f32 to vector<32x128xf32>
    %48 = arith.maximumf %46, %47 : vector<32x128xf32>
    %cst_46 = arith.constant 0.000000e+00 : bf16
    %49 = vector.broadcast %cst_46 : bf16 to vector<2x1x128xbf16>
    %c0_47 = arith.constant 0 : index
    %c0_48 = arith.constant 0 : index
    %c0_49 = arith.constant 0 : index
    %50 = vector.load %arg9[%c0_47, %c0_48, %c0_49] : memref<2x18x128xbf16, #tpu.memory_space<vmem>>, vector<2x1x128xbf16>
    tpu.vector_store %arg9[%c0_47, %c0_48, %c0_49], %49 {strides = array<i32>} : memref<2x18x128xbf16, #tpu.memory_space<vmem>>, vector<2x1x128xbf16>,
    %cst_50 = arith.constant 0.000000e+00 : bf16
    %51 = vector.broadcast %cst_50 : bf16 to vector<2x1x128xbf16>
    %c0_51 = arith.constant 0 : index
    %c17 = arith.constant 17 : index
    %c0_52 = arith.constant 0 : index
    %52 = vector.load %arg9[%c0_51, %c17, %c0_52] : memref<2x18x128xbf16, #tpu.memory_space<vmem>>, vector<2x1x128xbf16>
    tpu.vector_store %arg9[%c0_51, %c17, %c0_52], %51 {strides = array<i32>} : memref<2x18x128xbf16, #tpu.memory_space<vmem>>, vector<2x1x128xbf16>,
    %53 = arith.truncf %48 : vector<32x128xf32> to vector<32x128xbf16>
    %54 = vector.shape_cast %53 : vector<32x128xbf16> to vector<2x16x128xbf16>
    %c0_53 = arith.constant 0 : index
    %c1_54 = arith.constant 1 : index
    %c0_55 = arith.constant 0 : index
    %55 = vector.load %arg9[%c0_53, %c1_54, %c0_55] : memref<2x18x128xbf16, #tpu.memory_space<vmem>>, vector<2x16x128xbf16>
    tpu.vector_store %arg9[%c0_53, %c1_54, %c0_55], %54 {strides = array<i32>} : memref<2x18x128xbf16, #tpu.memory_space<vmem>>, vector<2x16x128xbf16>,
    %cst_56 = arith.constant 0.000000e+00 : f32
    %56 = vector.broadcast %cst_56 : f32 to vector<32x128xf32>
    %c0_57 = arith.constant 0 : index
    %c0_58 = arith.constant 0 : index
    %57 = vector.load %arg10[%c0_57, %c0_58] : memref<32x128xf32, #tpu.memory_space<vmem>>, vector<32x128xf32>
    tpu.vector_store %arg10[%c0_57, %c0_58], %56 {strides = array<i32>} : memref<32x128xf32, #tpu.memory_space<vmem>>, vector<32x128xf32>,
    %c0_59 = arith.constant 0 : index
    %c0_60 = arith.constant 0 : index
    %c0_61 = arith.constant 0 : index
    %58 = vector.load %arg9[%c0_59, %c0_60, %c0_61] : memref<2x18x128xbf16, #tpu.memory_space<vmem>>, vector<2x16x128xbf16>
    %59 = vector.shape_cast %58 : vector<2x16x128xbf16> to vector<32x128xbf16>
    %c0_62 = arith.constant 0 : index
    %c0_63 = arith.constant 0 : index
    %60 = vector.load %arg10[%c0_62, %c0_63] : memref<32x128xf32, #tpu.memory_space<vmem>>, vector<32x128xf32>
    %c0_64 = arith.constant 0 : index
    %c0_65 = arith.constant 0 : index
    %c0_66 = arith.constant 0 : index
    %61 = vector.load %arg2[%c0_64, %c0_65, %c0_66] : memref<3x128x128xbf16, #tpu.memory_space<vmem>>, vector<1x128x128xbf16>
    %62 = vector.shape_cast %61 : vector<1x128x128xbf16> to vector<128x128xbf16>
    %cst_67 = arith.constant dense<0.000000e+00> : vector<32x128xf32>
    %63 = tpu.matmul %59, %62, %cst_67 {dimension_numbers = #tpu.dot_dimension_numbers<[1], [0], [0], [1], [0, 0, 1, 1], [], []>} : vector<32x128xbf16>, vector<128x128xbf16>, vector<32x128xf32> -> vector<32x128xf32>
    %64 = arith.addf %60, %63 : vector<32x128xf32>
    %c0_68 = arith.constant 0 : index
    %c0_69 = arith.constant 0 : index
    %65 = vector.load %arg10[%c0_68, %c0_69] : memref<32x128xf32, #tpu.memory_space<vmem>>, vector<32x128xf32>
    tpu.vector_store %arg10[%c0_68, %c0_69], %64 {strides = array<i32>} : memref<32x128xf32, #tpu.memory_space<vmem>>, vector<32x128xf32>,
    %c0_70 = arith.constant 0 : index
    %c1_71 = arith.constant 1 : index
    %c0_72 = arith.constant 0 : index
    %66 = vector.load %arg9[%c0_70, %c1_71, %c0_72] : memref<2x18x128xbf16, #tpu.memory_space<vmem>>, vector<2x16x128xbf16>
    %67 = vector.shape_cast %66 : vector<2x16x128xbf16> to vector<32x128xbf16>
    %c0_73 = arith.constant 0 : index
    %c0_74 = arith.constant 0 : index
    %68 = vector.load %arg10[%c0_73, %c0_74] : memref<32x128xf32, #tpu.memory_space<vmem>>, vector<32x128xf32>
    %c1_75 = arith.constant 1 : index
    %c0_76 = arith.constant 0 : index
    %c0_77 = arith.constant 0 : index
    %69 = vector.load %arg2[%c1_75, %c0_76, %c0_77] : memref<3x128x128xbf16, #tpu.memory_space<vmem>>, vector<1x128x128xbf16>
    %70 = vector.shape_cast %69 : vector<1x128x128xbf16> to vector<128x128xbf16>
    %cst_78 = arith.constant dense<0.000000e+00> : vector<32x128xf32>
    %71 = tpu.matmul %67, %70, %cst_78 {dimension_numbers = #tpu.dot_dimension_numbers<[1], [0], [0], [1], [0, 0, 1, 1], [], []>} : vector<32x128xbf16>, vector<128x128xbf16>, vector<32x128xf32> -> vector<32x128xf32>
    %72 = arith.addf %68, %71 : vector<32x128xf32>
    %c0_79 = arith.constant 0 : index
    %c0_80 = arith.constant 0 : index
    %73 = vector.load %arg10[%c0_79, %c0_80] : memref<32x128xf32, #tpu.memory_space<vmem>>, vector<32x128xf32>
    tpu.vector_store %arg10[%c0_79, %c0_80], %72 {strides = array<i32>} : memref<32x128xf32, #tpu.memory_space<vmem>>, vector<32x128xf32>,
    %c0_81 = arith.constant 0 : index
    %c2_82 = arith.constant 2 : index
    %c0_83 = arith.constant 0 : index
    %74 = vector.load %arg9[%c0_81, %c2_82, %c0_83] : memref<2x18x128xbf16, #tpu.memory_space<vmem>>, vector<2x16x128xbf16>
    %75 = vector.shape_cast %74 : vector<2x16x128xbf16> to vector<32x128xbf16>
    %c0_84 = arith.constant 0 : index
    %c0_85 = arith.constant 0 : index
    %76 = vector.load %arg10[%c0_84, %c0_85] : memref<32x128xf32, #tpu.memory_space<vmem>>, vector<32x128xf32>
    %c2_86 = arith.constant 2 : index
    %c0_87 = arith.constant 0 : index
    %c0_88 = arith.constant 0 : index
    %77 = vector.load %arg2[%c2_86, %c0_87, %c0_88] : memref<3x128x128xbf16, #tpu.memory_space<vmem>>, vector<1x128x128xbf16>
    %78 = vector.shape_cast %77 : vector<1x128x128xbf16> to vector<128x128xbf16>
    %cst_89 = arith.constant dense<0.000000e+00> : vector<32x128xf32>
    %79 = tpu.matmul %75, %78, %cst_89 {dimension_numbers = #tpu.dot_dimension_numbers<[1], [0], [0], [1], [0, 0, 1, 1], [], []>} : vector<32x128xbf16>, vector<128x128xbf16>, vector<32x128xf32> -> vector<32x128xf32>
    %80 = arith.addf %76, %79 : vector<32x128xf32>
    %c0_90 = arith.constant 0 : index
    %c0_91 = arith.constant 0 : index
    %81 = vector.load %arg10[%c0_90, %c0_91] : memref<32x128xf32, #tpu.memory_space<vmem>>, vector<32x128xf32>
    tpu.vector_store %arg10[%c0_90, %c0_91], %80 {strides = array<i32>} : memref<32x128xf32, #tpu.memory_space<vmem>>, vector<32x128xf32>,
    %c0_92 = arith.constant 0 : index
    %c0_93 = arith.constant 0 : index
    %82 = vector.load %arg10[%c0_92, %c0_93] : memref<32x128xf32, #tpu.memory_space<vmem>>, vector<32x128xf32>
    %cst_94 = arith.constant dense<0.000000e+00> : vector<128xf32>
    %83 = vector.multi_reduction <add>, %82, %cst_94 [0] : vector<32x128xf32> to vector<128xf32>
    %84 = vector.shape_cast %83 : vector<128xf32> to vector<1x128xf32>
    %cst_95 = arith.constant dense<0.000000e+00> : vector<1x128xf32>
    %85 = tpu.matmul %84, %0, %cst_95 {dimension_numbers = #tpu.dot_dimension_numbers<[1], [0], [0], [1], [0, 0, 1, 1], [], []>} : vector<1x128xf32>, vector<128x128xf32>, vector<1x128xf32> -> vector<1x128xf32>
    %86 = vector.broadcast %85 : vector<1x128xf32> to vector<32x128xf32>
    %87 = arith.subf %82, %86 : vector<32x128xf32>
    %88 = arith.mulf %87, %87 : vector<32x128xf32>
    %cst_96 = arith.constant dense<0.000000e+00> : vector<128xf32>
    %89 = vector.multi_reduction <add>, %88, %cst_96 [0] : vector<32x128xf32> to vector<128xf32>
    %90 = vector.shape_cast %89 : vector<128xf32> to vector<1x128xf32>
    %cst_97 = arith.constant dense<0.000000e+00> : vector<1x128xf32>
    %91 = tpu.matmul %90, %0, %cst_97 {dimension_numbers = #tpu.dot_dimension_numbers<[1], [0], [0], [1], [0, 0, 1, 1], [], []>} : vector<1x128xf32>, vector<128x128xf32>, vector<1x128xf32> -> vector<1x128xf32>
    %c0_98 = arith.constant 0 : index
    %c0_99 = arith.constant 0 : index
    %92 = vector.load %arg6[%c0_98, %c0_99] : memref<1x128xf32, #tpu.memory_space<vmem>>, vector<1x128xf32>
    %cst_100 = arith.constant 9.99999974E-6 : f32
    %93 = vector.broadcast %cst_100 : f32 to vector<1x128xf32>
    %94 = arith.addf %91, %93 : vector<1x128xf32>
    %95 = math.rsqrt %94 : vector<1x128xf32>
    %96 = arith.mulf %92, %95 : vector<1x128xf32>
    %97 = vector.broadcast %96 : vector<1x128xf32> to vector<32x128xf32>
    %98 = arith.mulf %87, %97 : vector<32x128xf32>
    %c0_101 = arith.constant 0 : index
    %c0_102 = arith.constant 0 : index
    %99 = vector.load %arg7[%c0_101, %c0_102] : memref<1x128xf32, #tpu.memory_space<vmem>>, vector<1x128xf32>
    %100 = vector.broadcast %99 : vector<1x128xf32> to vector<32x128xf32>
    %101 = arith.addf %98, %100 : vector<32x128xf32>
    %cst_103 = arith.constant 0.000000e+00 : f32
    %102 = vector.broadcast %cst_103 : f32 to vector<32x128xf32>
    %103 = arith.maximumf %101, %102 : vector<32x128xf32>
    %c0_104 = arith.constant 0 : index
    %c0_105 = arith.constant 0 : index
    %104 = vector.load %arg8[%c0_104, %c0_105] : memref<32x128xf32, #tpu.memory_space<vmem>>, vector<32x128xf32>
    tpu.vector_store %arg8[%c0_104, %c0_105], %103 {strides = array<i32>} : memref<32x128xf32, #tpu.memory_space<vmem>>, vector<32x128xf32>,
    return
  }
}

</mosaic_0001>

<llo_original>
// kernel: tpu_custom_call.1
$region0: #{tpu_custom_call.1}
  #allocation0 [shape = 'u32[]', space=smem, size = 0x4, offset = 0x4, fixed_abs, tag = 'smem constant byte address 0x4 - core index']
  #allocation1 [shape = 'u32[144,128]{1,0:T(1,128)}', space=vmem, size = 0x12000, scoped, tag = 'internal scratch']
  #allocation2 [shape = 'bf16[2,18,128]{2,1,0:T(8,128)(2,1)}', space=vmem, size = 0x3000, scoped, tag = 'scratch operand']
  #allocation3 [shape = 'f32[32,128]{1,0:T(8,128)}', space=vmem, size = 0x4000, scoped, tag = 'scratch operand']
  %s0 = inlined_call_operand.vmem [shape: bf16[2,18,64], index: 0, kind: input, shape index: {}]
  %s1 = inlined_call_operand.hbm [shape: bf16[3,64,128], index: 1, kind: input, shape index: {}]
  %s2 = inlined_call_operand.hbm [shape: bf16[3,128,128], index: 2, kind: input, shape index: {}]
  %s3 = inlined_call_operand.hbm [shape: f32[128,128], index: 3, kind: input, shape index: {}]
  %s4 = inlined_call_operand.vmem [shape: f32[1,128], index: 4, kind: input, shape index: {}]
  %s5 = inlined_call_operand.vmem [shape: f32[1,128], index: 5, kind: input, shape index: {}]
  %s6 = inlined_call_operand.vmem [shape: f32[1,128], index: 6, kind: input, shape index: {}]
  %s7 = inlined_call_operand.vmem [shape: f32[1,128], index: 7, kind: input, shape index: {}]
  %s8 = inlined_call_operand.hbm [shape: f32[32,128], index: 8, kind: output, shape index: {}]
  %s9 = sld [smem:[#allocation0]]
  $region54: #{tpu_custom_call.1} parent=0
    _
  %s11 = ssub.s32 1, %s9
  %s12 = scalar_select 0, %s11, %s9
  $region1: #{tpu_custom_call.1} parent=0
    #allocation4 [shape = 'u8[49152]{0}', space=vmem, size = 0xc000, scoped, tag = 'input window, operand 1, single buffered']
    #allocation5 [shape = 's32[1]{0}', space=sflag, size = 0x4, scoped, tag = 'scoped memory for tpu_custom_call.1']
    #allocation6 [shape = 's32[1]{0}', space=sflag, size = 0x4, scoped, tag = 'scoped memory for tpu_custom_call.1']
    #allocation7 [shape = 'u8[98304]{0}', space=vmem, size = 0x18000, scoped, tag = 'input window, operand 2, single buffered']
    #allocation8 [shape = 's32[1]{0}', space=sflag, size = 0x4, scoped, tag = 'scoped memory for tpu_custom_call.1']
    #allocation9 [shape = 'u8[65536]{0}', space=vmem, size = 0x10000, scoped, tag = 'input window, operand 3, single buffered']
    #allocation10 [shape = 'u8[16384]{0}', space=vmem, size = 0x4000, scoped, tag = 'output window, operand 0, single buffered']
    %13 = vsyncpa [#allocation5], 0
    %14 = vsyncpa [#allocation8], 0
    %15 = vsyncpa [#allocation6], 0
    // Predicated region
    $region2: #{tpu_custom_call.1} parent=1 // pred_check
      _
    $region3: #{tpu_custom_call.1} parent=1 // pred_check_branch
      %17 = sbr.rel (0) target = $region5
    $region4: #{tpu_custom_call.1} parent=1 // pred_region
      _
    $region5: #{tpu_custom_call.1} parent=1 // pred_fallthru
      _
    // Predicated region
    $region6: #{tpu_custom_call.1} parent=1 // pred_check
      _
    $region7: #{tpu_custom_call.1} parent=1 // pred_check_branch
      %19 = sbr.rel (0) target = $region9
    $region8: #{tpu_custom_call.1} parent=1 // pred_region
      %s21 = ssub.s32 1536, 1536
      %22 = vsyncadd [#allocation5], %s21
      %s23 = sshll.u32 [#allocation4], 4
      %s24 = int_to_ptr.vmem [resolvable:$true] %s23
      %29 = dma.hbm_to_vmem [thread:$0]  %s1, 1536, %s24, [#allocation5], 64, 64, 4
    $region9: #{tpu_custom_call.1} parent=1 // pred_fallthru
      _
    // Predicated region
    $region10: #{tpu_custom_call.1} parent=1 // pred_check
      _
    $region11: #{tpu_custom_call.1} parent=1 // pred_check_branch
      %31 = sbr.rel (0) target = $region13
    $region12: #{tpu_custom_call.1} parent=1 // pred_region
      %s33 = ssub.s32 3072, 3072
      %34 = vsyncadd [#allocation8], %s33
      %s35 = sshll.u32 [#allocation7], 4
      %s36 = int_to_ptr.vmem [resolvable:$true] %s35
      %41 = dma.hbm_to_vmem [thread:$0]  %s2, 3072, %s36, [#allocation8], 64, 64, 4
    $region13: #{tpu_custom_call.1} parent=1 // pred_fallthru
      _
    // Predicated region
    $region14: #{tpu_custom_call.1} parent=1 // pred_check
      _
    $region15: #{tpu_custom_call.1} parent=1 // pred_check_branch
      %43 = sbr.rel (0) target = $region17
    $region16: #{tpu_custom_call.1} parent=1 // pred_region
      %s45 = ssub.s32 2048, 2048
      %46 = vsyncadd [#allocation8], %s45
      %s47 = sshll.u32 [#allocation9], 4
      %s48 = int_to_ptr.vmem [resolvable:$true] %s47
      %53 = dma.hbm_to_vmem [thread:$0]  %s3, 2048, %s48, [#allocation8], 128, 128, 8
    $region17: #{tpu_custom_call.1} parent=1 // pred_fallthru
      _
    // Predicated region
    $region18: #{tpu_custom_call.1} parent=1 // pred_check
      _
    $region19: #{tpu_custom_call.1} parent=1 // pred_check_branch
      %55 = sbr.rel (0) target = $region21
    $region20: #{tpu_custom_call.1} parent=1 // pred_region
      _
    $region21: #{tpu_custom_call.1} parent=1 // pred_fallthru
      _
    // Predicated region
    $region22: #{tpu_custom_call.1} parent=1 // pred_check
      _
    $region23: #{tpu_custom_call.1} parent=1 // pred_check_branch
      %57 = sbr.rel (0) target = $region25
    $region24: #{tpu_custom_call.1} parent=1 // pred_region
      _
    $region25: #{tpu_custom_call.1} parent=1 // pred_fallthru
      _
    // Predicated region
    $region26: #{tpu_custom_call.1} parent=1 // pred_check
      _
    $region27: #{tpu_custom_call.1} parent=1 // pred_check_branch
      %59 = sbr.rel (0) target = $region29
    $region28: #{tpu_custom_call.1} parent=1 // pred_region
      _
    $region29: #{tpu_custom_call.1} parent=1 // pred_fallthru
      _
    // Predicated region
    $region30: #{tpu_custom_call.1} parent=1 // pred_check
      _
    $region31: #{tpu_custom_call.1} parent=1 // pred_check_branch
      %61 = sbr.rel (0) target = $region33
    $region32: #{tpu_custom_call.1} parent=1 // pred_region
      _
    $region33: #{tpu_custom_call.1} parent=1 // pred_fallthru
      _
    // Predicated region
    $region34: #{tpu_custom_call.1} parent=1 // pred_check
      _
    $region35: #{tpu_custom_call.1} parent=1 // pred_check_branch
      %63 = sbr.rel (0) target = $region37
    $region36: #{tpu_custom_call.1} parent=1 // pred_region
      %64 = dma.done [#allocation5], 1536
    $region37: #{tpu_custom_call.1} parent=1 // pred_fallthru
      _
    // Predicated region
    $region38: #{tpu_custom_call.1} parent=1 // pred_check
      _
    $region39: #{tpu_custom_call.1} parent=1 // pred_check_branch
      %66 = sbr.rel (0) target = $region41
    $region40: #{tpu_custom_call.1} parent=1 // pred_region
      %67 = dma.done [#allocation8], 3072
    $region41: #{tpu_custom_call.1} parent=1 // pred_fallthru
      _
    // Predicated region
    $region42: #{tpu_custom_call.1} parent=1 // pred_check
      _
    $region43: #{tpu_custom_call.1} parent=1 // pred_check_branch
      %69 = sbr.rel (0) target = $region45
    $region44: #{tpu_custom_call.1} parent=1 // pred_region
      %70 = dma.done [#allocation8], 2048
    $region45: #{tpu_custom_call.1} parent=1 // pred_fallthru
      _
    %v72 = vld [vmem:[#allocation9] sm:$0xff]
    %v73 = vld [vmem:[#allocation9 + $0x8] sm:$0xff]
    %v74 = vld [vmem:[#allocation9 + $0x10] sm:$0xff]
    %v75 = vld [vmem:[#allocation9 + $0x18] sm:$0xff]
    %v76 = vld [vmem:[#allocation9 + $0x20] sm:$0xff]
    %v77 = vld [vmem:[#allocation9 + $0x28] sm:$0xff]
    %v78 = vld [vmem:[#allocation9 + $0x30] sm:$0xff]
    %v79 = vld [vmem:[#allocation9 + $0x38] sm:$0xff]
    %v80 = vld [vmem:[#allocation9 + $0x40] sm:$0xff]
    %v81 = vld [vmem:[#allocation9 + $0x48] sm:$0xff]
    %v82 = vld [vmem:[#allocation9 + $0x50] sm:$0xff]
    %v83 = vld [vmem:[#allocation9 + $0x58] sm:$0xff]
    %v84 = vld [vmem:[#allocation9 + $0x60] sm:$0xff]
    %v85 = vld [vmem:[#allocation9 + $0x68] sm:$0xff]
    %v86 = vld [vmem:[#allocation9 + $0x70] sm:$0xff]
    %v87 = vld [vmem:[#allocation9 + $0x78] sm:$0xff]
    %88 = vst [vmem:[#allocation3] sm:$0xff] 0.0
    %89 = vst [vmem:[#allocation3 + $0x8] sm:$0xff] 0.0
    %90 = vst [vmem:[#allocation3 + $0x10] sm:$0xff] 0.0
    %91 = vst [vmem:[#allocation3 + $0x18] sm:$0xff] 0.0
    %v92 = vld [vmem:[%s0] sm:$0xf]
    %v93 = vld [vmem:[%s0 + $0x4] sm:$0xf]
    %v94 = vld [vmem:[%s0 + $0xc] sm:$0xf]
    %v95 = vld [vmem:[%s0 + $0x10] sm:$0xf]
    %v96 = vld [vmem:[#allocation3] sm:$0xff]
    %v97 = vld [vmem:[#allocation3 + $0x8] sm:$0xff]
    %v98 = vld [vmem:[#allocation3 + $0x10] sm:$0xff]
    %v99 = vld [vmem:[#allocation3 + $0x18] sm:$0xff]
    %v100 = vld [vmem:[#allocation4] sm:$0xf]
    %v101 = vld [vmem:[#allocation4 + $0x4] sm:$0xf]
    %v102 = vld [vmem:[#allocation4 + $0x8] sm:$0xf]
    %v103 = vld [vmem:[#allocation4 + $0xc] sm:$0xf]
    %v104 = vld [vmem:[#allocation4 + $0x10] sm:$0xf]
    %v105 = vld [vmem:[#allocation4 + $0x14] sm:$0xf]
    %v106 = vld [vmem:[#allocation4 + $0x18] sm:$0xf]
    %v107 = vld [vmem:[#allocation4 + $0x1c] sm:$0xf]
    %v112 = vunpack.c.l.b16 %v92
    %v113 = vunpack.c.l.b16 %v93
    %v114 = vunpack.c.l.b16 %v94
    %v115 = vunpack.c.l.b16 %v95
    %v116 = vpack.c.b16 %v113, %v112
    %v117 = vpack.c.b16 %v115, %v114
    %v126 = vunpack.c.l.b16 %v100
    %v127 = vunpack.c.l.b16 %v101
    %v128 = vunpack.c.l.b16 %v102
    %v129 = vunpack.c.l.b16 %v103
    %v130 = vunpack.c.l.b16 %v104
    %v131 = vunpack.c.l.b16 %v105
    %v132 = vunpack.c.l.b16 %v106
    %v133 = vunpack.c.l.b16 %v107
    %v134 = vpack.c.b16 %v127, %v126
    %v135 = vpack.c.b16 %v129, %v128
    %v136 = vpack.c.b16 %v131, %v130
    %v137 = vpack.c.b16 %v133, %v132
    %vm142 = vcmask 523264
    %v144 = vsel %vm142, %v116, 0
    %v147 = vsel %vm142, %v117, 0
    %149 = vmatprep.subr.bf16.mxu0 0
    %150 = vmatpush1.bf16.msra.mxu0 0
    %151 = vmatprep.subr.bf16.mxu0 0
    %152 = vmatpush1.bf16.msra.mxu0 0
    %153 = vmatprep.subr.bf16.mxu0 0
    %154 = vmatpush1.bf16.msra.mxu0 0
    %155 = vmatprep.subr.bf16.mxu0 0
    %156 = vmatpush1.bf16.msra.mxu0 0
    %157 = vmatprep.subr.bf16.mxu0 0
    %158 = vmatpush1.bf16.msra.mxu0 %v137
    %159 = vmatprep.subr.bf16.mxu0 0
    %160 = vmatpush1.bf16.msra.mxu0 %v136
    %161 = vmatprep.subr.bf16.mxu0 0
    %162 = vmatpush1.bf16.msra.mxu0 %v135
    %163 = vmatprep.subr.bf16.mxu0 0
    %164 = vmatpush1.bf16.msra.mxu0 %v134
    %165 = vmatprep.subr.bf16.mxu0 0
    %166 = vmatpush2.bf16.msra.mxu0 0
    %167 = vmatprep.subr.bf16.mxu0 0
    %168 = vmatpush2.bf16.msra.mxu0 0
    %169 = vmatprep.subr.bf16.mxu0 0
    %170 = vmatpush2.bf16.msra.mxu0 0
    %171 = vmatprep.subr.bf16.mxu0 0
    %172 = vmatpush2.bf16.msra.mxu0 0
    %173 = vmatprep.subr.bf16.mxu0 0
    %174 = vmatpush2.bf16.msra.mxu0 0
    %175 = vmatprep.subr.bf16.mxu0 0
    %176 = vmatpush2.bf16.msra.mxu0 0
    %177 = vmatprep.subr.bf16.mxu0 0
    %178 = vmatpush2.bf16.msra.mxu0 0
    %179 = vmatprep.subr.bf16.mxu0 0
    %180 = vmatpush2.bf16.msra.mxu0 0
    %181 = vmatprep.mubr.bf16.mxu0 0
    %182 = vmatmul.mubr.bf16.gmra.mxu0 %v144
    %v183 = vpop.f32.mrf.mxu0
    %v184 = vadd.f32 0.0, %v183
    %v185 = vpop.f32.mrf.mxu0
    %v186 = vpop.f32.mrf.mxu0
    %v187 = vadd.f32 0.0, %v186
    %v188 = vpop.f32.mrf.mxu0
    %189 = vmatprep.mubr.bf16.mxu0 0
    %190 = vmatmul.mubr.bf16.gmra.mxu0 %v147
    %v191 = vpop.f32.mrf.mxu0
    %v192 = vadd.f32 0.0, %v191
    %v193 = vpop.f32.mrf.mxu0
    %v194 = vpop.f32.mrf.mxu0
    %v195 = vadd.f32 0.0, %v194
    %v196 = vpop.f32.mrf.mxu0
    %197 = vdwg.mxu0
    %v198 = vadd.f32 %v96, %v184
    %v199 = vadd.f32 %v97, %v187
    %v200 = vadd.f32 %v98, %v192
    %v201 = vadd.f32 %v99, %v195
    %202 = vst [vmem:[#allocation3] sm:$0xff] %v198
    %203 = vst [vmem:[#allocation3 + $0x8] sm:$0xff] %v199
    %204 = vst [vmem:[#allocation3 + $0x10] sm:$0xff] %v200
    %205 = vst [vmem:[#allocation3 + $0x18] sm:$0xff] %v201
    %v206 = vld [vmem:[%s0] sm:$0xf]
    %v207 = vld [vmem:[%s0 + $0x4] sm:$0xf]
    %v208 = vld [vmem:[%s0 + $0x8] sm:$0x1]
    %v209 = vld [vmem:[%s0 + $0xc] sm:$0xf]
    %v210 = vld [vmem:[%s0 + $0x10] sm:$0xf]
    %v211 = vld [vmem:[%s0 + $0x14] sm:$0x1]
    %vm212 = vsmask.f32 3328
    %vm213 = vsmask.f32 7440
    %vm214 = vmor %vm212, %vm213
    %v216 = vshrl.u32 %v206, 16
    %v218 = vrot.slane %v216, 4
    %v219 = vshll.u32 %v206, 16
    %v221 = vrot.slane %v219, 5
    %v222 = vor.u32 %v218, %v221
    %v223 = vrot.slane %v222, 4
    %v225 = vshll.u32 %v207, 16
    %v227 = vrot.slane %v225, 5
    %v228 = vsel %vm214, %v223, %v227
    %v229 = vshrl.u32 %v207, 16
    %v231 = vrot.slane %v229, 4
    %v232 = vor.u32 %v231, %v227
    %v233 = vrot.slane %v232, 4
    %v235 = vshll.u32 %v208, 16
    %v237 = vrot.slane %v235, 5
    %v238 = vsel %vm214, %v233, %v237
    %v240 = vshrl.u32 %v209, 16
    %v242 = vrot.slane %v240, 4
    %v243 = vshll.u32 %v209, 16
    %v245 = vrot.slane %v243, 5
    %v246 = vor.u32 %v242, %v245
    %v247 = vrot.slane %v246, 4
    %v249 = vshll.u32 %v210, 16
    %v251 = vrot.slane %v249, 5
    %v252 = vsel %vm214, %v247, %v251
    %v253 = vshrl.u32 %v210, 16
    %v255 = vrot.slane %v253, 4
    %v256 = vor.u32 %v255, %v251
    %v257 = vrot.slane %v256, 4
    %v259 = vshll.u32 %v211, 16
    %v261 = vrot.slane %v259, 5
    %v262 = vsel %vm214, %v257, %v261
    %v263 = vld [vmem:[#allocation3] sm:$0xff]
    %v264 = vld [vmem:[#allocation3 + $0x8] sm:$0xff]
    %v265 = vld [vmem:[#allocation3 + $0x10] sm:$0xff]
    %v266 = vld [vmem:[#allocation3 + $0x18] sm:$0xff]
    %s267 = scalar_lea.vmem [#allocation4], 32
    %v268 = vld [vmem:[%s267] sm:$0xf]
    %v269 = vld [vmem:[%s267 + $0x4] sm:$0xf]
    %v270 = vld [vmem:[%s267 + $0x8] sm:$0xf]
    %v271 = vld [vmem:[%s267 + $0xc] sm:$0xf]
    %v272 = vld [vmem:[%s267 + $0x10] sm:$0xf]
    %v273 = vld [vmem:[%s267 + $0x14] sm:$0xf]
    %v274 = vld [vmem:[%s267 + $0x18] sm:$0xf]
    %v275 = vld [vmem:[%s267 + $0x1c] sm:$0xf]
    %v276 = vunpack.c.l.b16 %v228
    %v277 = vunpack.c.l.b16 %v238
    %v278 = vunpack.c.l.b16 %v252
    %v279 = vunpack.c.l.b16 %v262
    %v280 = vpack.c.b16 %v277, %v276
    %v281 = vpack.c.b16 %v279, %v278
    %v290 = vunpack.c.l.b16 %v268
    %v291 = vunpack.c.l.b16 %v269
    %v292 = vunpack.c.l.b16 %v270
    %v293 = vunpack.c.l.b16 %v271
    %v294 = vunpack.c.l.b16 %v272
    %v295 = vunpack.c.l.b16 %v273
    %v296 = vunpack.c.l.b16 %v274
    %v297 = vunpack.c.l.b16 %v275
    %v298 = vpack.c.b16 %v291, %v290
    %v299 = vpack.c.b16 %v293, %v292
    %v300 = vpack.c.b16 %v295, %v294
    %v301 = vpack.c.b16 %v297, %v296
    %v307 = vsel %vm142, %v280, 0
    %v310 = vsel %vm142, %v281, 0
    %312 = vmatprep.subr.bf16.mxu0 0
    %313 = vmatpush1.bf16.msra.mxu0 0
    %314 = vmatprep.subr.bf16.mxu0 0
    %315 = vmatpush1.bf16.msra.mxu0 0
    %316 = vmatprep.subr.bf16.mxu0 0
    %317 = vmatpush1.bf16.msra.mxu0 0
    %318 = vmatprep.subr.bf16.mxu0 0
    %319 = vmatpush1.bf16.msra.mxu0 0
    %320 = vmatprep.subr.bf16.mxu0 0
    %321 = vmatpush1.bf16.msra.mxu0 %v301
    %322 = vmatprep.subr.bf16.mxu0 0
    %323 = vmatpush1.bf16.msra.mxu0 %v300
    %324 = vmatprep.subr.bf16.mxu0 0
    %325 = vmatpush1.bf16.msra.mxu0 %v299
    %326 = vmatprep.subr.bf16.mxu0 0
    %327 = vmatpush1.bf16.msra.mxu0 %v298
    %328 = vmatprep.subr.bf16.mxu0 0
    %329 = vmatpush2.bf16.msra.mxu0 0
    %330 = vmatprep.subr.bf16.mxu0 0
    %331 = vmatpush2.bf16.msra.mxu0 0
    %332 = vmatprep.subr.bf16.mxu0 0
    %333 = vmatpush2.bf16.msra.mxu0 0
    %334 = vmatprep.subr.bf16.mxu0 0
    %335 = vmatpush2.bf16.msra.mxu0 0
    %336 = vmatprep.subr.bf16.mxu0 0
    %337 = vmatpush2.bf16.msra.mxu0 0
    %338 = vmatprep.subr.bf16.mxu0 0
    %339 = vmatpush2.bf16.msra.mxu0 0
    %340 = vmatprep.subr.bf16.mxu0 0
    %341 = vmatpush2.bf16.msra.mxu0 0
    %342 = vmatprep.subr.bf16.mxu0 0
    %343 = vmatpush2.bf16.msra.mxu0 0
    %344 = vmatprep.mubr.bf16.mxu0 0
    %345 = vmatmul.mubr.bf16.gmra.mxu0 %v307
    %v346 = vpop.f32.mrf.mxu0
    %v347 = vadd.f32 0.0, %v346
    %v348 = vpop.f32.mrf.mxu0
    %v349 = vpop.f32.mrf.mxu0
    %v350 = vadd.f32 0.0, %v349
    %v351 = vpop.f32.mrf.mxu0
    %352 = vmatprep.mubr.bf16.mxu0 0
    %353 = vmatmul.mubr.bf16.gmra.mxu0 %v310
    %v354 = vpop.f32.mrf.mxu0
    %v355 = vadd.f32 0.0, %v354
    %v356 = vpop.f32.mrf.mxu0
    %v357 = vpop.f32.mrf.mxu0
    %v358 = vadd.f32 0.0, %v357
    %v359 = vpop.f32.mrf.mxu0
    %360 = vdwg.mxu0
    %v361 = vadd.f32 %v263, %v347
    %v362 = vadd.f32 %v264, %v350
    %v363 = vadd.f32 %v265, %v355
    %v364 = vadd.f32 %v266, %v358
    %365 = vst [vmem:[#allocation3] sm:$0xff] %v361
    %366 = vst [vmem:[#allocation3 + $0x8] sm:$0xff] %v362
    %367 = vst [vmem:[#allocation3 + $0x10] sm:$0xff] %v363
    %368 = vst [vmem:[#allocation3 + $0x18] sm:$0xff] %v364
    %v369 = vld [vmem:[%s0] sm:$0xe]
    %v370 = vld [vmem:[%s0 + $0x4] sm:$0xf]
    %v371 = vld [vmem:[%s0 + $0x8] sm:$0x1]
    %v372 = vld [vmem:[%s0 + $0xc] sm:$0xe]
    %v373 = vld [vmem:[%s0 + $0x10] sm:$0xf]
    %v374 = vld [vmem:[%s0 + $0x14] sm:$0x1]
    %vm381 = vcmask 1042432
    %vm382 = vcmask 1046532
    %vm383 = vmor %vm381, %vm382
    %v384 = vrot.slane %v369, 5
    %v385 = vrot.slane %v384, 4
    %v386 = vrot.slane %v370, 5
    %v387 = vsel %vm383, %v385, %v386
    %v388 = vrot.slane %v386, 4
    %v389 = vrot.slane %v371, 5
    %v390 = vsel %vm383, %v388, %v389
    %v391 = vrot.slane %v372, 5
    %v392 = vrot.slane %v391, 4
    %v393 = vrot.slane %v373, 5
    %v394 = vsel %vm383, %v392, %v393
    %v395 = vrot.slane %v393, 4
    %v396 = vrot.slane %v374, 5
    %v397 = vsel %vm383, %v395, %v396
    %v398 = vld [vmem:[#allocation3] sm:$0xff]
    %v399 = vld [vmem:[#allocation3 + $0x8] sm:$0xff]
    %v400 = vld [vmem:[#allocation3 + $0x10] sm:$0xff]
    %v401 = vld [vmem:[#allocation3 + $0x18] sm:$0xff]
    %s402 = scalar_lea.vmem [#allocation4], 64
    %v403 = vld [vmem:[%s402] sm:$0xf]
    %v404 = vld [vmem:[%s402 + $0x4] sm:$0xf]
    %v405 = vld [vmem:[%s402 + $0x8] sm:$0xf]
    %v406 = vld [vmem:[%s402 + $0xc] sm:$0xf]
    %v407 = vld [vmem:[%s402 + $0x10] sm:$0xf]
    %v408 = vld [vmem:[%s402 + $0x14] sm:$0xf]
    %v409 = vld [vmem:[%s402 + $0x18] sm:$0xf]
    %v410 = vld [vmem:[%s402 + $0x1c] sm:$0xf]
    %v411 = vunpack.c.l.b16 %v387
    %v412 = vunpack.c.l.b16 %v390
    %v413 = vunpack.c.l.b16 %v394
    %v414 = vunpack.c.l.b16 %v397
    %v415 = vpack.c.b16 %v412, %v411
    %v416 = vpack.c.b16 %v414, %v413
    %v425 = vunpack.c.l.b16 %v403
    %v426 = vunpack.c.l.b16 %v404
    %v427 = vunpack.c.l.b16 %v405
    %v428 = vunpack.c.l.b16 %v406
    %v429 = vunpack.c.l.b16 %v407
    %v430 = vunpack.c.l.b16 %v408
    %v431 = vunpack.c.l.b16 %v409
    %v432 = vunpack.c.l.b16 %v410
    %v433 = vpack.c.b16 %v426, %v425
    %v434 = vpack.c.b16 %v428, %v427
    %v435 = vpack.c.b16 %v430, %v429
    %v436 = vpack.c.b16 %v432, %v431
    %v442 = vsel %vm142, %v415, 0
    %v445 = vsel %vm142, %v416, 0
    %447 = vmatprep.subr.bf16.mxu0 0
    %448 = vmatpush1.bf16.msra.mxu0 0
    %449 = vmatprep.subr.bf16.mxu0 0
    %450 = vmatpush1.bf16.msra.mxu0 0
    %451 = vmatprep.subr.bf16.mxu0 0
    %452 = vmatpush1.bf16.msra.mxu0 0
    %453 = vmatprep.subr.bf16.mxu0 0
    %454 = vmatpush1.bf16.msra.mxu0 0
    %455 = vmatprep.subr.bf16.mxu0 0
    %456 = vmatpush1.bf16.msra.mxu0 %v436
    %457 = vmatprep.subr.bf16.mxu0 0
    %458 = vmatpush1.bf16.msra.mxu0 %v435
    %459 = vmatprep.subr.bf16.mxu0 0
    %460 = vmatpush1.bf16.msra.mxu0 %v434
    %461 = vmatprep.subr.bf16.mxu0 0
    %462 = vmatpush1.bf16.msra.mxu0 %v433
    %463 = vmatprep.subr.bf16.mxu0 0
    %464 = vmatpush2.bf16.msra.mxu0 0
    %465 = vmatprep.subr.bf16.mxu0 0
    %466 = vmatpush2.bf16.msra.mxu0 0
    %467 = vmatprep.subr.bf16.mxu0 0
    %468 = vmatpush2.bf16.msra.mxu0 0
    %469 = vmatprep.subr.bf16.mxu0 0
    %470 = vmatpush2.bf16.msra.mxu0 0
    %471 = vmatprep.subr.bf16.mxu0 0
    %472 = vmatpush2.bf16.msra.mxu0 0
    %473 = vmatprep.subr.bf16.mxu0 0
    %474 = vmatpush2.bf16.msra.mxu0 0
    %475 = vmatprep.subr.bf16.mxu0 0
    %476 = vmatpush2.bf16.msra.mxu0 0
    %477 = vmatprep.subr.bf16.mxu0 0
    %478 = vmatpush2.bf16.msra.mxu0 0
    %479 = vmatprep.mubr.bf16.mxu0 0
    %480 = vmatmul.mubr.bf16.gmra.mxu0 %v442
    %v481 = vpop.f32.mrf.mxu0
    %v482 = vadd.f32 0.0, %v481
    %v483 = vpop.f32.mrf.mxu0
    %v484 = vpop.f32.mrf.mxu0
    %v485 = vadd.f32 0.0, %v484
    %v486 = vpop.f32.mrf.mxu0
    %487 = vmatprep.mubr.bf16.mxu0 0
    %488 = vmatmul.mubr.bf16.gmra.mxu0 %v445
    %v489 = vpop.f32.mrf.mxu0
    %v490 = vadd.f32 0.0, %v489
    %v491 = vpop.f32.mrf.mxu0
    %v492 = vpop.f32.mrf.mxu0
    %v493 = vadd.f32 0.0, %v492
    %v494 = vpop.f32.mrf.mxu0
    %495 = vdwg.mxu0
    %v496 = vadd.f32 %v398, %v482
    %v497 = vadd.f32 %v399, %v485
    %v498 = vadd.f32 %v400, %v490
    %v499 = vadd.f32 %v401, %v493
    %500 = vst [vmem:[#allocation3] sm:$0xff] %v496
    %501 = vst [vmem:[#allocation3 + $0x8] sm:$0xff] %v497
    %502 = vst [vmem:[#allocation3 + $0x10] sm:$0xff] %v498
    %503 = vst [vmem:[#allocation3 + $0x18] sm:$0xff] %v499
    %v504 = vld [vmem:[#allocation3] sm:$0xff]
    %v505 = vld [vmem:[#allocation3 + $0x8] sm:$0xff]
    %v506 = vld [vmem:[#allocation3 + $0x10] sm:$0xff]
    %v507 = vld [vmem:[#allocation3 + $0x18] sm:$0xff]
    %v508 = vadd.f32 %v504, %v505
    %v509 = vadd.f32 %v508, %v506
    %v510 = vadd.f32 %v509, %v507
    %v511 = vrot.slane %v510, 4
    %v512 = vadd.f32 %v510, %v511
    %v513 = vrot.slane %v512, 2
    %v514 = vadd.f32 %v512, %v513
    %v515 = vrot.slane %v514, 1
    %v516 = vadd.f32 %v514, %v515
    %517 = vmatprep.subr.mxu0 0.0
    %518 = vmatpush1.msra.mxu0 %v87
    %519 = vmatprep.subr.mxu0 0.0
    %520 = vmatpush1.msra.mxu0 %v86
    %521 = vmatprep.subr.mxu0 0.0
    %522 = vmatpush1.msra.mxu0 %v85
    %523 = vmatprep.subr.mxu0 0.0
    %524 = vmatpush1.msra.mxu0 %v84
    %525 = vmatprep.subr.mxu0 0.0
    %526 = vmatpush1.msra.mxu0 %v83
    %527 = vmatprep.subr.mxu0 0.0
    %528 = vmatpush1.msra.mxu0 %v82
    %529 = vmatprep.subr.mxu0 0.0
    %530 = vmatpush1.msra.mxu0 %v81
    %531 = vmatprep.subr.mxu0 0.0
    %532 = vmatpush1.msra.mxu0 %v80
    %533 = vmatprep.subr.mxu0 0.0
    %534 = vmatpush1.msra.mxu0 %v79
    %535 = vmatprep.subr.mxu0 0.0
    %536 = vmatpush1.msra.mxu0 %v78
    %537 = vmatprep.subr.mxu0 0.0
    %538 = vmatpush1.msra.mxu0 %v77
    %539 = vmatprep.subr.mxu0 0.0
    %540 = vmatpush1.msra.mxu0 %v76
    %541 = vmatprep.subr.mxu0 0.0
    %542 = vmatpush1.msra.mxu0 %v75
    %543 = vmatprep.subr.mxu0 0.0
    %544 = vmatpush1.msra.mxu0 %v74
    %545 = vmatprep.subr.mxu0 0.0
    %546 = vmatpush1.msra.mxu0 %v73
    %547 = vmatprep.subr.mxu0 0.0
    %548 = vmatpush1.msra.mxu0 %v72
    %549 = vmatprep.subr.mxu0 0.0
    %550 = vmatpush2.msra.mxu0 0.0
    %551 = vmatprep.subr.mxu0 0.0
    %552 = vmatpush2.msra.mxu0 0.0
    %553 = vmatprep.subr.mxu0 0.0
    %554 = vmatpush2.msra.mxu0 0.0
    %555 = vmatprep.subr.mxu0 0.0
    %556 = vmatpush2.msra.mxu0 0.0
    %557 = vmatprep.subr.mxu0 0.0
    %558 = vmatpush2.msra.mxu0 0.0
    %559 = vmatprep.subr.mxu0 0.0
    %560 = vmatpush2.msra.mxu0 0.0
    %561 = vmatprep.subr.mxu0 0.0
    %562 = vmatpush2.msra.mxu0 0.0
    %563 = vmatprep.subr.mxu0 0.0
    %564 = vmatpush2.msra.mxu0 0.0
    %565 = vmatprep.subr.mxu0 0.0
    %566 = vmatpush2.msra.mxu0 0.0
    %567 = vmatprep.subr.mxu0 0.0
    %568 = vmatpush2.msra.mxu0 0.0
    %569 = vmatprep.subr.mxu0 0.0
    %570 = vmatpush2.msra.mxu0 0.0
    %571 = vmatprep.subr.mxu0 0.0
    %572 = vmatpush2.msra.mxu0 0.0
    %573 = vmatprep.subr.mxu0 0.0
    %574 = vmatpush2.msra.mxu0 0.0
    %575 = vmatprep.subr.mxu0 0.0
    %576 = vmatpush2.msra.mxu0 0.0
    %577 = vmatprep.subr.mxu0 0.0
    %578 = vmatpush2.msra.mxu0 0.0
    %579 = vmatprep.subr.mxu0 0.0
    %580 = vmatpush2.msra.mxu0 0.0
    %581 = vmatprep.mubr.f32.mxu0 0.0
    %582 = vmatmul.mubr.f32.gmra.mxu0 %v516
    %v583 = vpop.f32.mrf.mxu0
    %v584 = vadd.f32 0.0, %v583
    %v585 = vpop.f32.mrf.mxu0
    %586 = vdwg.mxu0
    %v587 = vlaneseq
    %v588 = vshrl.u32 %v587, 7
    %v589 = vsub.s32 0, %v588
    %v590 = vrot.slane %v584, %v589
    %v591 = vsub.f32 %v504, %v590
    %v592 = vsub.f32 %v505, %v590
    %v593 = vsub.f32 %v506, %v590
    %v594 = vsub.f32 %v507, %v590
    %v595 = vmul.f32 %v591, %v591
    %v596 = vmul.f32 %v592, %v592
    %v597 = vmul.f32 %v593, %v593
    %v598 = vmul.f32 %v594, %v594
    %v599 = vadd.f32 %v595, %v596
    %v600 = vadd.f32 %v599, %v597
    %v601 = vadd.f32 %v600, %v598
    %v602 = vrot.slane %v601, 4
    %v603 = vadd.f32 %v601, %v602
    %v604 = vrot.slane %v603, 2
    %v605 = vadd.f32 %v603, %v604
    %v606 = vrot.slane %v605, 1
    %v607 = vadd.f32 %v605, %v606
    %v608 = vld [vmem:[%s4] sm:$0x1]
    %609 = vmatprep.subr.mxu0 0.0
    %610 = vmatpush1.msra.mxu0 %v87
    %611 = vmatprep.subr.mxu0 0.0
    %612 = vmatpush1.msra.mxu0 %v86
    %613 = vmatprep.subr.mxu0 0.0
    %614 = vmatpush1.msra.mxu0 %v85
    %615 = vmatprep.subr.mxu0 0.0
    %616 = vmatpush1.msra.mxu0 %v84
    %617 = vmatprep.subr.mxu0 0.0
    %618 = vmatpush1.msra.mxu0 %v83
    %619 = vmatprep.subr.mxu0 0.0
    %620 = vmatpush1.msra.mxu0 %v82
    %621 = vmatprep.subr.mxu0 0.0
    %622 = vmatpush1.msra.mxu0 %v81
    %623 = vmatprep.subr.mxu0 0.0
    %624 = vmatpush1.msra.mxu0 %v80
    %625 = vmatprep.subr.mxu0 0.0
    %626 = vmatpush1.msra.mxu0 %v79
    %627 = vmatprep.subr.mxu0 0.0
    %628 = vmatpush1.msra.mxu0 %v78
    %629 = vmatprep.subr.mxu0 0.0
    %630 = vmatpush1.msra.mxu0 %v77
    %631 = vmatprep.subr.mxu0 0.0
    %632 = vmatpush1.msra.mxu0 %v76
    %633 = vmatprep.subr.mxu0 0.0
    %634 = vmatpush1.msra.mxu0 %v75
    %635 = vmatprep.subr.mxu0 0.0
    %636 = vmatpush1.msra.mxu0 %v74
    %637 = vmatprep.subr.mxu0 0.0
    %638 = vmatpush1.msra.mxu0 %v73
    %639 = vmatprep.subr.mxu0 0.0
    %640 = vmatpush1.msra.mxu0 %v72
    %641 = vmatprep.subr.mxu0 0.0
    %642 = vmatpush2.msra.mxu0 0.0
    %643 = vmatprep.subr.mxu0 0.0
    %644 = vmatpush2.msra.mxu0 0.0
    %645 = vmatprep.subr.mxu0 0.0
    %646 = vmatpush2.msra.mxu0 0.0
    %647 = vmatprep.subr.mxu0 0.0
    %648 = vmatpush2.msra.mxu0 0.0
    %649 = vmatprep.subr.mxu0 0.0
    %650 = vmatpush2.msra.mxu0 0.0
    %651 = vmatprep.subr.mxu0 0.0
    %652 = vmatpush2.msra.mxu0 0.0
    %653 = vmatprep.subr.mxu0 0.0
    %654 = vmatpush2.msra.mxu0 0.0
    %655 = vmatprep.subr.mxu0 0.0
    %656 = vmatpush2.msra.mxu0 0.0
    %657 = vmatprep.subr.mxu0 0.0
    %658 = vmatpush2.msra.mxu0 0.0
    %659 = vmatprep.subr.mxu0 0.0
    %660 = vmatpush2.msra.mxu0 0.0
    %661 = vmatprep.subr.mxu0 0.0
    %662 = vmatpush2.msra.mxu0 0.0
    %663 = vmatprep.subr.mxu0 0.0
    %664 = vmatpush2.msra.mxu0 0.0
    %665 = vmatprep.subr.mxu0 0.0
    %666 = vmatpush2.msra.mxu0 0.0
    %667 = vmatprep.subr.mxu0 0.0
    %668 = vmatpush2.msra.mxu0 0.0
    %669 = vmatprep.subr.mxu0 0.0
    %670 = vmatpush2.msra.mxu0 0.0
    %671 = vmatprep.subr.mxu0 0.0
    %672 = vmatpush2.msra.mxu0 0.0
    %673 = vmatprep.mubr.f32.mxu0 0.0
    %674 = vmatmul.mubr.f32.gmra.mxu0 %v607
    %v675 = vpop.f32.mrf.mxu0
    %v676 = vadd.f32 1e-05, %v675
    %v677 = vpop.f32.mrf.mxu0
    %678 = vdwg.mxu0
    %v679 = vrsqrt.pop %v676
    %v680 = vmul.f32 %v608, %v679
    %v682 = vlaneseq
    %v683 = vshrl.u32 %v682, 7
    %v684 = vsub.s32 0, %v683
    %v685 = vrot.slane %v680, %v684
    %v687 = vmul.f32 %v591, %v685
    %v688 = vmul.f32 %v592, %v685
    %v689 = vmul.f32 %v593, %v685
    %v690 = vmul.f32 %v594, %v685
    %v691 = vld [vmem:[%s5] sm:$0x1]
    %v693 = vlaneseq
    %v694 = vshrl.u32 %v693, 7
    %v695 = vsub.s32 0, %v694
    %v696 = vrot.slane %v691, %v695
    %v698 = vadd.f32 %v687, %v696
    %v699 = vadd.f32 %v688, %v696
    %v700 = vadd.f32 %v689, %v696
    %v701 = vadd.f32 %v690, %v696
    %v702 = vmax.f32 %v698, 0.0
    %v703 = vmax.f32 %v699, 0.0
    %v704 = vmax.f32 %v700, 0.0
    %v705 = vmax.f32 %v701, 0.0
    %vm706 = vcmask 1040384
    %vm707 = vsmask.f32 256
    %vm708 = vmand %vm706, %vm707
    %v709 = vld [vmem:[#allocation2] sm:$0x1]
    %v710 = vsel %vm708, 0, %v709
    %711 = vst [vmem:[#allocation2] sm:$0x1] %v710
    %v712 = vld [vmem:[#allocation2 + $0xc] sm:$0x1]
    %v713 = vsel %vm708, 0, %v712
    %714 = vst [vmem:[#allocation2 + $0xc] sm:$0x1] %v713
    %vm715 = vsmask.f32 7938
    %vm716 = vmand %vm706, %vm715
    %v717 = vld [vmem:[#allocation2 + $0x8] sm:$0x1]
    %v718 = vsel %vm716, 0, %v717
    %719 = vst [vmem:[#allocation2 + $0x8] sm:$0x1] %v718
    %v720 = vld [vmem:[#allocation2 + $0x14] sm:$0x1]
    %v721 = vsel %vm716, 0, %v720
    %722 = vst [vmem:[#allocation2 + $0x14] sm:$0x1] %v721
    %v723 = vpack.c.bf16 %v703, %v702
    %v724 = vpack.c.bf16 %v705, %v704
    %v727 = vunpack.c.l.b16 %v723
    %v728 = vunpack.c.h.b16 %v723
    %v729 = vunpack.c.l.b16 %v724
    %v730 = vunpack.c.h.b16 %v724
    %v731 = vpack.c.b16 %v727, %v727
    %v732 = vpack.c.b16 %v728, %v728
    %v733 = vpack.c.b16 %v729, %v729
    %v734 = vpack.c.b16 %v730, %v730
    %vm735 = vsmask.f32 4368
    %vm736 = vmor %vm707, %vm735
    %v738 = vshrl.u32 %v731, 16
    %v740 = vrot.slane %v738, 7
    %v741 = vshll.u32 %v731, 16
    %v743 = vor.u32 %v740, %v741
    %v744 = vrot.slane %v740, 4
    %v746 = vshrl.u32 %v732, 16
    %v748 = vrot.slane %v746, 7
    %v749 = vshll.u32 %v732, 16
    %v751 = vor.u32 %v748, %v749
    %v752 = vsel %vm736, %v744, %v751
    %v753 = vrot.slane %v748, 4
    %v755 = vshrl.u32 %v733, 16
    %v757 = vrot.slane %v755, 7
    %v758 = vshll.u32 %v733, 16
    %v760 = vor.u32 %v757, %v758
    %v761 = vrot.slane %v757, 4
    %v763 = vshrl.u32 %v734, 16
    %v765 = vrot.slane %v763, 7
    %v766 = vshll.u32 %v734, 16
    %v768 = vor.u32 %v765, %v766
    %v769 = vsel %vm736, %v761, %v768
    %v770 = vrot.slane %v765, 4
    %vm777 = vcmask 1043456
    %vm778 = vmand %vm777, %vm715
    %v779 = vld [vmem:[#allocation2] sm:$0xf]
    %v780 = vsel %vm778, %v743, %v779
    %781 = vst [vmem:[#allocation2] sm:$0xf] %v780
    %782 = vst [vmem:[#allocation2 + $0x4] sm:$0xf] %v752
    %v783 = vld [vmem:[#allocation2 + $0x8] sm:$0x1]
    %v784 = vsel %vm708, %v753, %v783
    %785 = vst [vmem:[#allocation2 + $0x8] sm:$0x1] %v784
    %v786 = vld [vmem:[#allocation2 + $0xc] sm:$0xf]
    %v787 = vsel %vm778, %v760, %v786
    %788 = vst [vmem:[#allocation2 + $0xc] sm:$0xf] %v787
    %789 = vst [vmem:[#allocation2 + $0x10] sm:$0xf] %v769
    %v790 = vld [vmem:[#allocation2 + $0x14] sm:$0x1]
    %v791 = vsel %vm708, %v770, %v790
    %792 = vst [vmem:[#allocation2 + $0x14] sm:$0x1] %v791
    %793 = vst [vmem:[#allocation3] sm:$0xff] 0.0
    %794 = vst [vmem:[#allocation3 + $0x8] sm:$0xff] 0.0
    %795 = vst [vmem:[#allocation3 + $0x10] sm:$0xff] 0.0
    %796 = vst [vmem:[#allocation3 + $0x18] sm:$0xff] 0.0
    %v797 = vld [vmem:[#allocation2] sm:$0xf]
    %v798 = vld [vmem:[#allocation2 + $0x4] sm:$0xf]
    %v799 = vld [vmem:[#allocation2 + $0xc] sm:$0xf]
    %v800 = vld [vmem:[#allocation2 + $0x10] sm:$0xf]
    %v801 = vld [vmem:[#allocation3] sm:$0xff]
    %v802 = vld [vmem:[#allocation3 + $0x8] sm:$0xff]
    %v803 = vld [vmem:[#allocation3 + $0x10] sm:$0xff]
    %v804 = vld [vmem:[#allocation3 + $0x18] sm:$0xff]
    %v805 = vld [vmem:[#allocation7] sm:$0xf]
    %v806 = vld [vmem:[#allocation7 + $0x4] sm:$0xf]
    %v807 = vld [vmem:[#allocation7 + $0x8] sm:$0xf]
    %v808 = vld [vmem:[#allocation7 + $0xc] sm:$0xf]
    %v809 = vld [vmem:[#allocation7 + $0x10] sm:$0xf]
    %v810 = vld [vmem:[#allocation7 + $0x14] sm:$0xf]
    %v811 = vld [vmem:[#allocation7 + $0x18] sm:$0xf]
    %v812 = vld [vmem:[#allocation7 + $0x1c] sm:$0xf]
    %v813 = vld [vmem:[#allocation7 + $0x20] sm:$0xf]
    %v814 = vld [vmem:[#allocation7 + $0x24] sm:$0xf]
    %v815 = vld [vmem:[#allocation7 + $0x28] sm:$0xf]
    %v816 = vld [vmem:[#allocation7 + $0x2c] sm:$0xf]
    %v817 = vld [vmem:[#allocation7 + $0x30] sm:$0xf]
    %v818 = vld [vmem:[#allocation7 + $0x34] sm:$0xf]
    %v819 = vld [vmem:[#allocation7 + $0x38] sm:$0xf]
    %v820 = vld [vmem:[#allocation7 + $0x3c] sm:$0xf]
    %v825 = vunpack.c.l.b16 %v797
    %v826 = vunpack.c.l.b16 %v798
    %v827 = vunpack.c.l.b16 %v799
    %v828 = vunpack.c.l.b16 %v800
    %v829 = vpack.c.b16 %v826, %v825
    %v830 = vpack.c.b16 %v828, %v827
    %v849 = vunpack.c.l.b16 %v805
    %v850 = vunpack.c.l.b16 %v806
    %v851 = vunpack.c.l.b16 %v807
    %v852 = vunpack.c.l.b16 %v808
    %v853 = vunpack.c.l.b16 %v809
    %v854 = vunpack.c.l.b16 %v810
    %v855 = vunpack.c.l.b16 %v811
    %v856 = vunpack.c.l.b16 %v812
    %v857 = vunpack.c.l.b16 %v813
    %v858 = vunpack.c.l.b16 %v814
    %v859 = vunpack.c.l.b16 %v815
    %v860 = vunpack.c.l.b16 %v816
    %v861 = vunpack.c.l.b16 %v817
    %v862 = vunpack.c.l.b16 %v818
    %v863 = vunpack.c.l.b16 %v819
    %v864 = vunpack.c.l.b16 %v820
    %v865 = vpack.c.b16 %v850, %v849
    %v866 = vpack.c.b16 %v852, %v851
    %v867 = vpack.c.b16 %v854, %v853
    %v868 = vpack.c.b16 %v856, %v855
    %v869 = vpack.c.b16 %v858, %v857
    %v870 = vpack.c.b16 %v860, %v859
    %v871 = vpack.c.b16 %v862, %v861
    %v872 = vpack.c.b16 %v864, %v863
    %881 = vmatprep.subr.bf16.mxu0 0
    %882 = vmatpush1.bf16.msra.mxu0 %v872
    %883 = vmatprep.subr.bf16.mxu0 0
    %884 = vmatpush1.bf16.msra.mxu0 %v871
    %885 = vmatprep.subr.bf16.mxu0 0
    %886 = vmatpush1.bf16.msra.mxu0 %v870
    %887 = vmatprep.subr.bf16.mxu0 0
    %888 = vmatpush1.bf16.msra.mxu0 %v869
    %889 = vmatprep.subr.bf16.mxu0 0
    %890 = vmatpush1.bf16.msra.mxu0 %v868
    %891 = vmatprep.subr.bf16.mxu0 0
    %892 = vmatpush1.bf16.msra.mxu0 %v867
    %893 = vmatprep.subr.bf16.mxu0 0
    %894 = vmatpush1.bf16.msra.mxu0 %v866
    %895 = vmatprep.subr.bf16.mxu0 0
    %896 = vmatpush1.bf16.msra.mxu0 %v865
    %897 = vmatprep.subr.bf16.mxu0 0
    %898 = vmatpush2.bf16.msra.mxu0 0
    %899 = vmatprep.subr.bf16.mxu0 0
    %900 = vmatpush2.bf16.msra.mxu0 0
    %901 = vmatprep.subr.bf16.mxu0 0
    %902 = vmatpush2.bf16.msra.mxu0 0
    %903 = vmatprep.subr.bf16.mxu0 0
    %904 = vmatpush2.bf16.msra.mxu0 0
    %905 = vmatprep.subr.bf16.mxu0 0
    %906 = vmatpush2.bf16.msra.mxu0 0
    %907 = vmatprep.subr.bf16.mxu0 0
    %908 = vmatpush2.bf16.msra.mxu0 0
    %909 = vmatprep.subr.bf16.mxu0 0
    %910 = vmatpush2.bf16.msra.mxu0 0
    %911 = vmatprep.subr.bf16.mxu0 0
    %912 = vmatpush2.bf16.msra.mxu0 0
    %913 = vmatprep.mubr.bf16.mxu0 0
    %914 = vmatmul.mubr.bf16.gmra.mxu0 %v829
    %v915 = vpop.f32.mrf.mxu0
    %v916 = vadd.f32 0.0, %v915
    %v917 = vpop.f32.mrf.mxu0
    %v918 = vpop.f32.mrf.mxu0
    %v919 = vadd.f32 0.0, %v918
    %v920 = vpop.f32.mrf.mxu0
    %921 = vmatprep.mubr.bf16.mxu0 0
    %922 = vmatmul.mubr.bf16.gmra.mxu0 %v830
    %v923 = vpop.f32.mrf.mxu0
    %v924 = vadd.f32 0.0, %v923
    %v925 = vpop.f32.mrf.mxu0
    %v926 = vpop.f32.mrf.mxu0
    %v927 = vadd.f32 0.0, %v926
    %v928 = vpop.f32.mrf.mxu0
    %929 = vdwg.mxu0
    %v930 = vadd.f32 %v801, %v916
    %v931 = vadd.f32 %v802, %v919
    %v932 = vadd.f32 %v803, %v924
    %v933 = vadd.f32 %v804, %v927
    %934 = vst [vmem:[#allocation3] sm:$0xff] %v930
    %935 = vst [vmem:[#allocation3 + $0x8] sm:$0xff] %v931
    %936 = vst [vmem:[#allocation3 + $0x10] sm:$0xff] %v932
    %937 = vst [vmem:[#allocation3 + $0x18] sm:$0xff] %v933
    %v938 = vld [vmem:[#allocation2] sm:$0xf]
    %v939 = vld [vmem:[#allocation2 + $0x4] sm:$0xf]
    %v940 = vld [vmem:[#allocation2 + $0x8] sm:$0x1]
    %v941 = vld [vmem:[#allocation2 + $0xc] sm:$0xf]
    %v942 = vld [vmem:[#allocation2 + $0x10] sm:$0xf]
    %v943 = vld [vmem:[#allocation2 + $0x14] sm:$0x1]
    %v945 = vshrl.u32 %v938, 16
    %v947 = vrot.slane %v945, 4
    %v948 = vshll.u32 %v938, 16
    %v950 = vrot.slane %v948, 5
    %v951 = vor.u32 %v947, %v950
    %v952 = vrot.slane %v951, 4
    %v954 = vshll.u32 %v939, 16
    %v956 = vrot.slane %v954, 5
    %v957 = vsel %vm214, %v952, %v956
    %v958 = vshrl.u32 %v939, 16
    %v960 = vrot.slane %v958, 4
    %v961 = vor.u32 %v960, %v956
    %v962 = vrot.slane %v961, 4
    %v964 = vshll.u32 %v940, 16
    %v966 = vrot.slane %v964, 5
    %v967 = vsel %vm214, %v962, %v966
    %v969 = vshrl.u32 %v941, 16
    %v971 = vrot.slane %v969, 4
    %v972 = vshll.u32 %v941, 16
    %v974 = vrot.slane %v972, 5
    %v975 = vor.u32 %v971, %v974
    %v976 = vrot.slane %v975, 4
    %v978 = vshll.u32 %v942, 16
    %v980 = vrot.slane %v978, 5
    %v981 = vsel %vm214, %v976, %v980
    %v982 = vshrl.u32 %v942, 16
    %v984 = vrot.slane %v982, 4
    %v985 = vor.u32 %v984, %v980
    %v986 = vrot.slane %v985, 4
    %v988 = vshll.u32 %v943, 16
    %v990 = vrot.slane %v988, 5
    %v991 = vsel %vm214, %v986, %v990
    %v992 = vld [vmem:[#allocation3] sm:$0xff]
    %v993 = vld [vmem:[#allocation3 + $0x8] sm:$0xff]
    %v994 = vld [vmem:[#allocation3 + $0x10] sm:$0xff]
    %v995 = vld [vmem:[#allocation3 + $0x18] sm:$0xff]
    %s996 = scalar_lea.vmem [#allocation7], 64
    %v997 = vld [vmem:[%s996] sm:$0xf]
    %v998 = vld [vmem:[%s996 + $0x4] sm:$0xf]
    %v999 = vld [vmem:[%s996 + $0x8] sm:$0xf]
    %v1000 = vld [vmem:[%s996 + $0xc] sm:$0xf]
    %v1001 = vld [vmem:[%s996 + $0x10] sm:$0xf]
    %v1002 = vld [vmem:[%s996 + $0x14] sm:$0xf]
    %v1003 = vld [vmem:[%s996 + $0x18] sm:$0xf]
    %v1004 = vld [vmem:[%s996 + $0x1c] sm:$0xf]
    %v1005 = vld [vmem:[%s996 + $0x20] sm:$0xf]
    %v1006 = vld [vmem:[%s996 + $0x24] sm:$0xf]
    %v1007 = vld [vmem:[%s996 + $0x28] sm:$0xf]
    %v1008 = vld [vmem:[%s996 + $0x2c] sm:$0xf]
    %v1009 = vld [vmem:[%s996 + $0x30] sm:$0xf]
    %v1010 = vld [vmem:[%s996 + $0x34] sm:$0xf]
    %v1011 = vld [vmem:[%s996 + $0x38] sm:$0xf]
    %v1012 = vld [vmem:[%s996 + $0x3c] sm:$0xf]
    %v1013 = vunpack.c.l.b16 %v957
    %v1014 = vunpack.c.l.b16 %v967
    %v1015 = vunpack.c.l.b16 %v981
    %v1016 = vunpack.c.l.b16 %v991
    %v1017 = vpack.c.b16 %v1014, %v1013
    %v1018 = vpack.c.b16 %v1016, %v1015
    %v1037 = vunpack.c.l.b16 %v997
    %v1038 = vunpack.c.l.b16 %v998
    %v1039 = vunpack.c.l.b16 %v999
    %v1040 = vunpack.c.l.b16 %v1000
    %v1041 = vunpack.c.l.b16 %v1001
    %v1042 = vunpack.c.l.b16 %v1002
    %v1043 = vunpack.c.l.b16 %v1003
    %v1044 = vunpack.c.l.b16 %v1004
    %v1045 = vunpack.c.l.b16 %v1005
    %v1046 = vunpack.c.l.b16 %v1006
    %v1047 = vunpack.c.l.b16 %v1007
    %v1048 = vunpack.c.l.b16 %v1008
    %v1049 = vunpack.c.l.b16 %v1009
    %v1050 = vunpack.c.l.b16 %v1010
    %v1051 = vunpack.c.l.b16 %v1011
    %v1052 = vunpack.c.l.b16 %v1012
    %v1053 = vpack.c.b16 %v1038, %v1037
    %v1054 = vpack.c.b16 %v1040, %v1039
    %v1055 = vpack.c.b16 %v1042, %v1041
    %v1056 = vpack.c.b16 %v1044, %v1043
    %v1057 = vpack.c.b16 %v1046, %v1045
    %v1058 = vpack.c.b16 %v1048, %v1047
    %v1059 = vpack.c.b16 %v1050, %v1049
    %v1060 = vpack.c.b16 %v1052, %v1051
    %1069 = vmatprep.subr.bf16.mxu0 0
    %1070 = vmatpush1.bf16.msra.mxu0 %v1060
    %1071 = vmatprep.subr.bf16.mxu0 0
    %1072 = vmatpush1.bf16.msra.mxu0 %v1059
    %1073 = vmatprep.subr.bf16.mxu0 0
    %1074 = vmatpush1.bf16.msra.mxu0 %v1058
    %1075 = vmatprep.subr.bf16.mxu0 0
    %1076 = vmatpush1.bf16.msra.mxu0 %v1057
    %1077 = vmatprep.subr.bf16.mxu0 0
    %1078 = vmatpush1.bf16.msra.mxu0 %v1056
    %1079 = vmatprep.subr.bf16.mxu0 0
    %1080 = vmatpush1.bf16.msra.mxu0 %v1055
    %1081 = vmatprep.subr.bf16.mxu0 0
    %1082 = vmatpush1.bf16.msra.mxu0 %v1054
    %1083 = vmatprep.subr.bf16.mxu0 0
    %1084 = vmatpush1.bf16.msra.mxu0 %v1053
    %1085 = vmatprep.subr.bf16.mxu0 0
    %1086 = vmatpush2.bf16.msra.mxu0 0
    %1087 = vmatprep.subr.bf16.mxu0 0
    %1088 = vmatpush2.bf16.msra.mxu0 0
    %1089 = vmatprep.subr.bf16.mxu0 0
    %1090 = vmatpush2.bf16.msra.mxu0 0
    %1091 = vmatprep.subr.bf16.mxu0 0
    %1092 = vmatpush2.bf16.msra.mxu0 0
    %1093 = vmatprep.subr.bf16.mxu0 0
    %1094 = vmatpush2.bf16.msra.mxu0 0
    %1095 = vmatprep.subr.bf16.mxu0 0
    %1096 = vmatpush2.bf16.msra.mxu0 0
    %1097 = vmatprep.subr.bf16.mxu0 0
    %1098 = vmatpush2.bf16.msra.mxu0 0
    %1099 = vmatprep.subr.bf16.mxu0 0
    %1100 = vmatpush2.bf16.msra.mxu0 0
    %1101 = vmatprep.mubr.bf16.mxu0 0
    %1102 = vmatmul.mubr.bf16.gmra.mxu0 %v1017
    %v1103 = vpop.f32.mrf.mxu0
    %v1104 = vadd.f32 0.0, %v1103
    %v1105 = vpop.f32.mrf.mxu0
    %v1106 = vpop.f32.mrf.mxu0
    %v1107 = vadd.f32 0.0, %v1106
    %v1108 = vpop.f32.mrf.mxu0
    %1109 = vmatprep.mubr.bf16.mxu0 0
    %1110 = vmatmul.mubr.bf16.gmra.mxu0 %v1018
    %v1111 = vpop.f32.mrf.mxu0
    %v1112 = vadd.f32 0.0, %v1111
    %v1113 = vpop.f32.mrf.mxu0
    %v1114 = vpop.f32.mrf.mxu0
    %v1115 = vadd.f32 0.0, %v1114
    %v1116 = vpop.f32.mrf.mxu0
    %1117 = vdwg.mxu0
    %v1118 = vadd.f32 %v992, %v1104
    %v1119 = vadd.f32 %v993, %v1107
    %v1120 = vadd.f32 %v994, %v1112
    %v1121 = vadd.f32 %v995, %v1115
    %1122 = vst [vmem:[#allocation3] sm:$0xff] %v1118
    %1123 = vst [vmem:[#allocation3 + $0x8] sm:$0xff] %v1119
    %1124 = vst [vmem:[#allocation3 + $0x10] sm:$0xff] %v1120
    %1125 = vst [vmem:[#allocation3 + $0x18] sm:$0xff] %v1121
    %v1126 = vld [vmem:[#allocation2] sm:$0xe]
    %v1127 = vld [vmem:[#allocation2 + $0x4] sm:$0xf]
    %v1128 = vld [vmem:[#allocation2 + $0x8] sm:$0x1]
    %v1129 = vld [vmem:[#allocation2 + $0xc] sm:$0xe]
    %v1130 = vld [vmem:[#allocation2 + $0x10] sm:$0xf]
    %v1131 = vld [vmem:[#allocation2 + $0x14] sm:$0x1]
    %v1138 = vrot.slane %v1126, 5
    %v1139 = vrot.slane %v1138, 4
    %v1140 = vrot.slane %v1127, 5
    %v1141 = vsel %vm383, %v1139, %v1140
    %v1142 = vrot.slane %v1140, 4
    %v1143 = vrot.slane %v1128, 5
    %v1144 = vsel %vm383, %v1142, %v1143
    %v1145 = vrot.slane %v1129, 5
    %v1146 = vrot.slane %v1145, 4
    %v1147 = vrot.slane %v1130, 5
    %v1148 = vsel %vm383, %v1146, %v1147
    %v1149 = vrot.slane %v1147, 4
    %v1150 = vrot.slane %v1131, 5
    %v1151 = vsel %vm383, %v1149, %v1150
    %v1152 = vld [vmem:[#allocation3] sm:$0xff]
    %v1153 = vld [vmem:[#allocation3 + $0x8] sm:$0xff]
    %v1154 = vld [vmem:[#allocation3 + $0x10] sm:$0xff]
    %v1155 = vld [vmem:[#allocation3 + $0x18] sm:$0xff]
    %s1156 = scalar_lea.vmem [#allocation7], 128
    %v1157 = vld [vmem:[%s1156] sm:$0xf]
    %v1158 = vld [vmem:[%s1156 + $0x4] sm:$0xf]
    %v1159 = vld [vmem:[%s1156 + $0x8] sm:$0xf]
    %v1160 = vld [vmem:[%s1156 + $0xc] sm:$0xf]
    %v1161 = vld [vmem:[%s1156 + $0x10] sm:$0xf]
    %v1162 = vld [vmem:[%s1156 + $0x14] sm:$0xf]
    %v1163 = vld [vmem:[%s1156 + $0x18] sm:$0xf]
    %v1164 = vld [vmem:[%s1156 + $0x1c] sm:$0xf]
    %v1165 = vld [vmem:[%s1156 + $0x20] sm:$0xf]
    %v1166 = vld [vmem:[%s1156 + $0x24] sm:$0xf]
    %v1167 = vld [vmem:[%s1156 + $0x28] sm:$0xf]
    %v1168 = vld [vmem:[%s1156 + $0x2c] sm:$0xf]
    %v1169 = vld [vmem:[%s1156 + $0x30] sm:$0xf]
    %v1170 = vld [vmem:[%s1156 + $0x34] sm:$0xf]
    %v1171 = vld [vmem:[%s1156 + $0x38] sm:$0xf]
    %v1172 = vld [vmem:[%s1156 + $0x3c] sm:$0xf]
    %v1173 = vunpack.c.l.b16 %v1141
    %v1174 = vunpack.c.l.b16 %v1144
    %v1175 = vunpack.c.l.b16 %v1148
    %v1176 = vunpack.c.l.b16 %v1151
    %v1177 = vpack.c.b16 %v1174, %v1173
    %v1178 = vpack.c.b16 %v1176, %v1175
    %v1197 = vunpack.c.l.b16 %v1157
    %v1198 = vunpack.c.l.b16 %v1158
    %v1199 = vunpack.c.l.b16 %v1159
    %v1200 = vunpack.c.l.b16 %v1160
    %v1201 = vunpack.c.l.b16 %v1161
    %v1202 = vunpack.c.l.b16 %v1162
    %v1203 = vunpack.c.l.b16 %v1163
    %v1204 = vunpack.c.l.b16 %v1164
    %v1205 = vunpack.c.l.b16 %v1165
    %v1206 = vunpack.c.l.b16 %v1166
    %v1207 = vunpack.c.l.b16 %v1167
    %v1208 = vunpack.c.l.b16 %v1168
    %v1209 = vunpack.c.l.b16 %v1169
    %v1210 = vunpack.c.l.b16 %v1170
    %v1211 = vunpack.c.l.b16 %v1171
    %v1212 = vunpack.c.l.b16 %v1172
    %v1213 = vpack.c.b16 %v1198, %v1197
    %v1214 = vpack.c.b16 %v1200, %v1199
    %v1215 = vpack.c.b16 %v1202, %v1201
    %v1216 = vpack.c.b16 %v1204, %v1203
    %v1217 = vpack.c.b16 %v1206, %v1205
    %v1218 = vpack.c.b16 %v1208, %v1207
    %v1219 = vpack.c.b16 %v1210, %v1209
    %v1220 = vpack.c.b16 %v1212, %v1211
    %1229 = vmatprep.subr.bf16.mxu0 0
    %1230 = vmatpush1.bf16.msra.mxu0 %v1220
    %1231 = vmatprep.subr.bf16.mxu0 0
    %1232 = vmatpush1.bf16.msra.mxu0 %v1219
    %1233 = vmatprep.subr.bf16.mxu0 0
    %1234 = vmatpush1.bf16.msra.mxu0 %v1218
    %1235 = vmatprep.subr.bf16.mxu0 0
    %1236 = vmatpush1.bf16.msra.mxu0 %v1217
    %1237 = vmatprep.subr.bf16.mxu0 0
    %1238 = vmatpush1.bf16.msra.mxu0 %v1216
    %1239 = vmatprep.subr.bf16.mxu0 0
    %1240 = vmatpush1.bf16.msra.mxu0 %v1215
    %1241 = vmatprep.subr.bf16.mxu0 0
    %1242 = vmatpush1.bf16.msra.mxu0 %v1214
    %1243 = vmatprep.subr.bf16.mxu0 0
    %1244 = vmatpush1.bf16.msra.mxu0 %v1213
    %1245 = vmatprep.subr.bf16.mxu0 0
    %1246 = vmatpush2.bf16.msra.mxu0 0
    %1247 = vmatprep.subr.bf16.mxu0 0
    %1248 = vmatpush2.bf16.msra.mxu0 0
    %1249 = vmatprep.subr.bf16.mxu0 0
    %1250 = vmatpush2.bf16.msra.mxu0 0
    %1251 = vmatprep.subr.bf16.mxu0 0
    %1252 = vmatpush2.bf16.msra.mxu0 0
    %1253 = vmatprep.subr.bf16.mxu0 0
    %1254 = vmatpush2.bf16.msra.mxu0 0
    %1255 = vmatprep.subr.bf16.mxu0 0
    %1256 = vmatpush2.bf16.msra.mxu0 0
    %1257 = vmatprep.subr.bf16.mxu0 0
    %1258 = vmatpush2.bf16.msra.mxu0 0
    %1259 = vmatprep.subr.bf16.mxu0 0
    %1260 = vmatpush2.bf16.msra.mxu0 0
    %1261 = vmatprep.mubr.bf16.mxu0 0
    %1262 = vmatmul.mubr.bf16.gmra.mxu0 %v1177
    %v1263 = vpop.f32.mrf.mxu0
    %v1264 = vadd.f32 0.0, %v1263
    %v1265 = vpop.f32.mrf.mxu0
    %v1266 = vpop.f32.mrf.mxu0
    %v1267 = vadd.f32 0.0, %v1266
    %v1268 = vpop.f32.mrf.mxu0
    %1269 = vmatprep.mubr.bf16.mxu0 0
    %1270 = vmatmul.mubr.bf16.gmra.mxu0 %v1178
    %v1271 = vpop.f32.mrf.mxu0
    %v1272 = vadd.f32 0.0, %v1271
    %v1273 = vpop.f32.mrf.mxu0
    %v1274 = vpop.f32.mrf.mxu0
    %v1275 = vadd.f32 0.0, %v1274
    %v1276 = vpop.f32.mrf.mxu0
    %1277 = vdwg.mxu0
    %v1278 = vadd.f32 %v1152, %v1264
    %v1279 = vadd.f32 %v1153, %v1267
    %v1280 = vadd.f32 %v1154, %v1272
    %v1281 = vadd.f32 %v1155, %v1275
    %1282 = vst [vmem:[#allocation3] sm:$0xff] %v1278
    %1283 = vst [vmem:[#allocation3 + $0x8] sm:$0xff] %v1279
    %1284 = vst [vmem:[#allocation3 + $0x10] sm:$0xff] %v1280
    %1285 = vst [vmem:[#allocation3 + $0x18] sm:$0xff] %v1281
    %v1286 = vld [vmem:[#allocation3] sm:$0xff]
    %v1287 = vld [vmem:[#allocation3 + $0x8] sm:$0xff]
    %v1288 = vld [vmem:[#allocation3 + $0x10] sm:$0xff]
    %v1289 = vld [vmem:[#allocation3 + $0x18] sm:$0xff]
    %v1290 = vadd.f32 %v1286, %v1287
    %v1291 = vadd.f32 %v1290, %v1288
    %v1292 = vadd.f32 %v1291, %v1289
    %v1293 = vrot.slane %v1292, 4
    %v1294 = vadd.f32 %v1292, %v1293
    %v1295 = vrot.slane %v1294, 2
    %v1296 = vadd.f32 %v1294, %v1295
    %v1297 = vrot.slane %v1296, 1
    %v1298 = vadd.f32 %v1296, %v1297
    %1299 = vmatprep.subr.mxu0 0.0
    %1300 = vmatpush1.msra.mxu0 %v87
    %1301 = vmatprep.subr.mxu0 0.0
    %1302 = vmatpush1.msra.mxu0 %v86
    %1303 = vmatprep.subr.mxu0 0.0
    %1304 = vmatpush1.msra.mxu0 %v85
    %1305 = vmatprep.subr.mxu0 0.0
    %1306 = vmatpush1.msra.mxu0 %v84
    %1307 = vmatprep.subr.mxu0 0.0
    %1308 = vmatpush1.msra.mxu0 %v83
    %1309 = vmatprep.subr.mxu0 0.0
    %1310 = vmatpush1.msra.mxu0 %v82
    %1311 = vmatprep.subr.mxu0 0.0
    %1312 = vmatpush1.msra.mxu0 %v81
    %1313 = vmatprep.subr.mxu0 0.0
    %1314 = vmatpush1.msra.mxu0 %v80
    %1315 = vmatprep.subr.mxu0 0.0
    %1316 = vmatpush1.msra.mxu0 %v79
    %1317 = vmatprep.subr.mxu0 0.0
    %1318 = vmatpush1.msra.mxu0 %v78
    %1319 = vmatprep.subr.mxu0 0.0
    %1320 = vmatpush1.msra.mxu0 %v77
    %1321 = vmatprep.subr.mxu0 0.0
    %1322 = vmatpush1.msra.mxu0 %v76
    %1323 = vmatprep.subr.mxu0 0.0
    %1324 = vmatpush1.msra.mxu0 %v75
    %1325 = vmatprep.subr.mxu0 0.0
    %1326 = vmatpush1.msra.mxu0 %v74
    %1327 = vmatprep.subr.mxu0 0.0
    %1328 = vmatpush1.msra.mxu0 %v73
    %1329 = vmatprep.subr.mxu0 0.0
    %1330 = vmatpush1.msra.mxu0 %v72
    %1331 = vmatprep.subr.mxu0 0.0
    %1332 = vmatpush2.msra.mxu0 0.0
    %1333 = vmatprep.subr.mxu0 0.0
    %1334 = vmatpush2.msra.mxu0 0.0
    %1335 = vmatprep.subr.mxu0 0.0
    %1336 = vmatpush2.msra.mxu0 0.0
    %1337 = vmatprep.subr.mxu0 0.0
    %1338 = vmatpush2.msra.mxu0 0.0
    %1339 = vmatprep.subr.mxu0 0.0
    %1340 = vmatpush2.msra.mxu0 0.0
    %1341 = vmatprep.subr.mxu0 0.0
    %1342 = vmatpush2.msra.mxu0 0.0
    %1343 = vmatprep.subr.mxu0 0.0
    %1344 = vmatpush2.msra.mxu0 0.0
    %1345 = vmatprep.subr.mxu0 0.0
    %1346 = vmatpush2.msra.mxu0 0.0
    %1347 = vmatprep.subr.mxu0 0.0
    %1348 = vmatpush2.msra.mxu0 0.0
    %1349 = vmatprep.subr.mxu0 0.0
    %1350 = vmatpush2.msra.mxu0 0.0
    %1351 = vmatprep.subr.mxu0 0.0
    %1352 = vmatpush2.msra.mxu0 0.0
    %1353 = vmatprep.subr.mxu0 0.0
    %1354 = vmatpush2.msra.mxu0 0.0
    %1355 = vmatprep.subr.mxu0 0.0
    %1356 = vmatpush2.msra.mxu0 0.0
    %1357 = vmatprep.subr.mxu0 0.0
    %1358 = vmatpush2.msra.mxu0 0.0
    %1359 = vmatprep.subr.mxu0 0.0
    %1360 = vmatpush2.msra.mxu0 0.0
    %1361 = vmatprep.subr.mxu0 0.0
    %1362 = vmatpush2.msra.mxu0 0.0
    %1363 = vmatprep.mubr.f32.mxu0 0.0
    %1364 = vmatmul.mubr.f32.gmra.mxu0 %v1298
    %v1365 = vpop.f32.mrf.mxu0
    %v1366 = vadd.f32 0.0, %v1365
    %v1367 = vpop.f32.mrf.mxu0
    %1368 = vdwg.mxu0
    %v1369 = vlaneseq
    %v1370 = vshrl.u32 %v1369, 7
    %v1371 = vsub.s32 0, %v1370
    %v1372 = vrot.slane %v1366, %v1371
    %v1373 = vsub.f32 %v1286, %v1372
    %v1374 = vsub.f32 %v1287, %v1372
    %v1375 = vsub.f32 %v1288, %v1372
    %v1376 = vsub.f32 %v1289, %v1372
    %v1377 = vmul.f32 %v1373, %v1373
    %v1378 = vmul.f32 %v1374, %v1374
    %v1379 = vmul.f32 %v1375, %v1375
    %v1380 = vmul.f32 %v1376, %v1376
    %v1381 = vadd.f32 %v1377, %v1378
    %v1382 = vadd.f32 %v1381, %v1379
    %v1383 = vadd.f32 %v1382, %v1380
    %v1384 = vrot.slane %v1383, 4
    %v1385 = vadd.f32 %v1383, %v1384
    %v1386 = vrot.slane %v1385, 2
    %v1387 = vadd.f32 %v1385, %v1386
    %v1388 = vrot.slane %v1387, 1
    %v1389 = vadd.f32 %v1387, %v1388
    %v1390 = vld [vmem:[%s6] sm:$0x1]
    %1391 = vmatprep.subr.mxu0 0.0
    %1392 = vmatpush1.msra.mxu0 %v87
    %1393 = vmatprep.subr.mxu0 0.0
    %1394 = vmatpush1.msra.mxu0 %v86
    %1395 = vmatprep.subr.mxu0 0.0
    %1396 = vmatpush1.msra.mxu0 %v85
    %1397 = vmatprep.subr.mxu0 0.0
    %1398 = vmatpush1.msra.mxu0 %v84
    %1399 = vmatprep.subr.mxu0 0.0
    %1400 = vmatpush1.msra.mxu0 %v83
    %1401 = vmatprep.subr.mxu0 0.0
    %1402 = vmatpush1.msra.mxu0 %v82
    %1403 = vmatprep.subr.mxu0 0.0
    %1404 = vmatpush1.msra.mxu0 %v81
    %1405 = vmatprep.subr.mxu0 0.0
    %1406 = vmatpush1.msra.mxu0 %v80
    %1407 = vmatprep.subr.mxu0 0.0
    %1408 = vmatpush1.msra.mxu0 %v79
    %1409 = vmatprep.subr.mxu0 0.0
    %1410 = vmatpush1.msra.mxu0 %v78
    %1411 = vmatprep.subr.mxu0 0.0
    %1412 = vmatpush1.msra.mxu0 %v77
    %1413 = vmatprep.subr.mxu0 0.0
    %1414 = vmatpush1.msra.mxu0 %v76
    %1415 = vmatprep.subr.mxu0 0.0
    %1416 = vmatpush1.msra.mxu0 %v75
    %1417 = vmatprep.subr.mxu0 0.0
    %1418 = vmatpush1.msra.mxu0 %v74
    %1419 = vmatprep.subr.mxu0 0.0
    %1420 = vmatpush1.msra.mxu0 %v73
    %1421 = vmatprep.subr.mxu0 0.0
    %1422 = vmatpush1.msra.mxu0 %v72
    %1423 = vmatprep.subr.mxu0 0.0
    %1424 = vmatpush2.msra.mxu0 0.0
    %1425 = vmatprep.subr.mxu0 0.0
    %1426 = vmatpush2.msra.mxu0 0.0
    %1427 = vmatprep.subr.mxu0 0.0
    %1428 = vmatpush2.msra.mxu0 0.0
    %1429 = vmatprep.subr.mxu0 0.0
    %1430 = vmatpush2.msra.mxu0 0.0
    %1431 = vmatprep.subr.mxu0 0.0
    %1432 = vmatpush2.msra.mxu0 0.0
    %1433 = vmatprep.subr.mxu0 0.0
    %1434 = vmatpush2.msra.mxu0 0.0
    %1435 = vmatprep.subr.mxu0 0.0
    %1436 = vmatpush2.msra.mxu0 0.0
    %1437 = vmatprep.subr.mxu0 0.0
    %1438 = vmatpush2.msra.mxu0 0.0
    %1439 = vmatprep.subr.mxu0 0.0
    %1440 = vmatpush2.msra.mxu0 0.0
    %1441 = vmatprep.subr.mxu0 0.0
    %1442 = vmatpush2.msra.mxu0 0.0
    %1443 = vmatprep.subr.mxu0 0.0
    %1444 = vmatpush2.msra.mxu0 0.0
    %1445 = vmatprep.subr.mxu0 0.0
    %1446 = vmatpush2.msra.mxu0 0.0
    %1447 = vmatprep.subr.mxu0 0.0
    %1448 = vmatpush2.msra.mxu0 0.0
    %1449 = vmatprep.subr.mxu0 0.0
    %1450 = vmatpush2.msra.mxu0 0.0
    %1451 = vmatprep.subr.mxu0 0.0
    %1452 = vmatpush2.msra.mxu0 0.0
    %1453 = vmatprep.subr.mxu0 0.0
    %1454 = vmatpush2.msra.mxu0 0.0
    %1455 = vmatprep.mubr.f32.mxu0 0.0
    %1456 = vmatmul.mubr.f32.gmra.mxu0 %v1389
    %v1457 = vpop.f32.mrf.mxu0
    %v1458 = vadd.f32 1e-05, %v1457
    %v1459 = vpop.f32.mrf.mxu0
    %1460 = vdwg.mxu0
    %v1461 = vrsqrt.pop %v1458
    %v1462 = vmul.f32 %v1390, %v1461
    %v1464 = vlaneseq
    %v1465 = vshrl.u32 %v1464, 7
    %v1466 = vsub.s32 0, %v1465
    %v1467 = vrot.slane %v1462, %v1466
    %v1469 = vmul.f32 %v1373, %v1467
    %v1470 = vmul.f32 %v1374, %v1467
    %v1471 = vmul.f32 %v1375, %v1467
    %v1472 = vmul.f32 %v1376, %v1467
    %v1473 = vld [vmem:[%s7] sm:$0x1]
    %v1475 = vlaneseq
    %v1476 = vshrl.u32 %v1475, 7
    %v1477 = vsub.s32 0, %v1476
    %v1478 = vrot.slane %v1473, %v1477
    %v1480 = vadd.f32 %v1469, %v1478
    %v1481 = vadd.f32 %v1470, %v1478
    %v1482 = vadd.f32 %v1471, %v1478
    %v1483 = vadd.f32 %v1472, %v1478
    %v1484 = vmax.f32 %v1480, 0.0
    %v1485 = vmax.f32 %v1481, 0.0
    %v1486 = vmax.f32 %v1482, 0.0
    %v1487 = vmax.f32 %v1483, 0.0
    %1488 = vst [vmem:[#allocation10] sm:$0xff] %v1484
    %1489 = vst [vmem:[#allocation10 + $0x8] sm:$0xff] %v1485
    %1490 = vst [vmem:[#allocation10 + $0x10] sm:$0xff] %v1486
    %1491 = vst [vmem:[#allocation10 + $0x18] sm:$0xff] %v1487
    // Predicated region
    $region46: #{tpu_custom_call.1} parent=1 // pred_check
      _
    $region47: #{tpu_custom_call.1} parent=1 // pred_check_branch
      %1493 = sbr.rel (0) target = $region49
    $region48: #{tpu_custom_call.1} parent=1 // pred_region
      %s1495 = ssub.s32 512, 512
      %1496 = vsyncadd [#allocation6], %s1495
      %s1497 = sshll.u32 [#allocation10], 4
      %s1498 = int_to_ptr.vmem [resolvable:$true] %s1497
      %1503 = dma.vmem_to_hbm [thread:$0]  %s1498, 512, %s8, [#allocation6], 128, 128, 8
    $region49: #{tpu_custom_call.1} parent=1 // pred_fallthru
      _
    // Predicated region
    $region50: #{tpu_custom_call.1} parent=1 // pred_check
      _
    $region51: #{tpu_custom_call.1} parent=1 // pred_check_branch
      %1505 = sbr.rel (0) target = $region53
    $region52: #{tpu_custom_call.1} parent=1 // pred_region
      %1506 = dma.done [#allocation6], 512
    $region53: #{tpu_custom_call.1} parent=1 // pred_fallthru
      _
    %1507 = vsyncpa [#allocation5], 1
    %1508 = vsyncpa [#allocation8], 1
    %1509 = vsyncpa [#allocation6], 1

</llo_original>
